<compile_context>
chip_gen: v6e
topology: v6e:2x2x1
jax: 0.10.0
libtpu: 0.0.40
codegen_flags: <defaults>
</compile_context>

<pallas_src>
import functools
import math

import jax
import jax.numpy as jnp
import numpy as np
from jax.experimental import pallas as pl
from jax.experimental.pallas import tpu as pltpu

_BIG = 1e30
_PAD_COORD = 1e8   # padded gt columns land far away from every pixel


def _round_up(x, m):
    return ((x + m - 1) // m) * m


def _whd_kernel(pix_ref, gt_ref, out_ref, wmin_ref, t1_ref, ne_ref, bce_ref,
                *, max_dist, has_pix_pad):
    t = pl.program_id(1)
    n_t = pl.num_programs(1)

    @pl.when(t == 0)
    def _init():
        wmin_ref[...] = jnp.full(wmin_ref.shape, _BIG, wmin_ref.dtype)
        t1_ref[...] = jnp.zeros(t1_ref.shape, t1_ref.dtype)
        ne_ref[...] = jnp.zeros(ne_ref.shape, ne_ref.dtype)
        bce_ref[...] = jnp.zeros(bce_ref.shape, bce_ref.dtype)

    pix = pix_ref[0]                      # (8, TP)  pixel fields, lane-dense
    gt = gt_ref[0]                        # (Mp, 8)  compacted gt points

    px = pix[0:1, :]                      # (1, TP) scaled row coord
    py = pix[1:2, :]                      # (1, TP) scaled col coord
    p = pix[2:3, :]                       # (1, TP) prob map
    yt = pix[3:4, :]                      # (1, TP) BCE target (raw gt_map)

    gx = gt[:, 0:1]                       # (Mp, 1)
    gy = gt[:, 1:2]                       # (Mp, 1)

    # distance tile: gt points on sublanes, pixels on lanes (no abs; squared)
    dx = gx - px                          # (Mp, TP)
    dy = gy - py
    d2 = dx * dx + dy * dy
    d = jnp.sqrt(d2)                      # single EUP pass, reused below

    # term1: min over gt of the distance (padded gt columns have coords ~1e8
    # -> d ~1e8 >> real, no mask needed), then p-weighted partial sums.
    dmin = jnp.min(d, axis=0, keepdims=True)                   # (1, TP)
    t1_ref[...] += jnp.sum(p * dmin, keepdims=True)
    ne_ref[...] += jnp.sum(p, keepdims=True)

    # term2: weighted distance (FMA form), running min over pixel tiles.
    w = p * (d - max_dist) + max_dist                           # (Mp, TP)
    if has_pix_pad:
        pv = pix[4:5, :]                                        # (1, TP)
        w = w + (1.0 - pv) * _BIG
    wmin_ref[...] = jnp.minimum(wmin_ref[...],
                                jnp.min(w, axis=1, keepdims=True))

    # BCE partial sum (PyTorch BCELoss clamps log at -100); padded pixels have
    # p == yt == 0 -> contribute exactly 0.
    log_p = jnp.maximum(jnp.log(p), -100.0)
    log_1mp = jnp.maximum(jnp.log(1.0 - p), -100.0)
    bce_ref[...] += -jnp.sum(yt * log_p + (1.0 - yt) * log_1mp, keepdims=True)

    @pl.when(t == n_t - 1)
    def _finalize():
        gv = gt[:, 2:3]                                         # (Mp, 1) valid mask
        t2num = jnp.sum(gv * wmin_ref[...], keepdims=True)      # (1, 1)
        lane = jax.lax.broadcasted_iota(jnp.int32, (1, 128), 1)
        vals = (jnp.where(lane == 0, t1_ref[...], 0.0)
                + jnp.where(lane == 1, ne_ref[...], 0.0)
                + jnp.where(lane == 2, bce_ref[...], 0.0)
                + jnp.where(lane == 3, t2num, 0.0))
        out_ref[0] = vals


def weighted_hausdorff_distance(prob_map, gt_map, orig_sizes, *, height, width,
                                pixel_tile=512):
    """Forward pass of WeightedHausdorffDistance(resized_height=H, resized_width=W).

    Eager wrapper (data-dependent gt compaction, like the PyTorch module).
    """
    B, H, W = prob_map.shape
    assert (H, W) == (height, width)
    N = H * W
    max_dist = math.sqrt(height ** 2 + width ** 2)
    f32 = jnp.float32

    # ---- host-side gt compaction (mirrors map2coord / nonzero) -----------------
    gm_np = np.asarray(jax.device_get(gt_map), np.float32).reshape(B, N)
    mask_np = gm_np >= 1.0
    counts = mask_np.sum(axis=1).astype(np.int64)
    orig_np = np.asarray(jax.device_get(orig_sizes), np.float32)
    norm_np = orig_np / np.array([height, width], np.float32)        # (B, 2)

    max_cnt = int(counts.max()) if counts.max() > 0 else 1
    Mp = max(128, _round_up(max_cnt, 128))

    gt_pack = np.zeros((B, Mp, 8), np.float32)
    gt_pack[:, :, 0] = _PAD_COORD
    gt_pack[:, :, 1] = _PAD_COORD
    for b in range(B):
        idx = np.nonzero(mask_np[b])[0]
        m = idx.shape[0]
        if m == 0:
            # TODO(synk): n_gt == 0 raises in the PyTorch reference (min over empty dim).
            continue
        gt_pack[b, :m, 0] = (idx // W).astype(np.float32) * norm_np[b, 0]
        gt_pack[b, :m, 1] = (idx % W).astype(np.float32) * norm_np[b, 1]
        gt_pack[b, :m, 2] = 1.0

    # ---- pixel-axis tiling; keep (Mp, TP) temporaries small for v7x VMEM -------
    TP = pixel_tile
    assert TP % 128 == 0
    while TP > 128 and Mp * TP > (1 << 20):          # <= 4 MiB per f32 temporary
        TP = max(128, (TP // 2) // 128 * 128)
    if N <= TP:
        Np = _round_up(N, 128)
        TP = Np
    else:
        Np = _round_up(N, TP)
    n_ptiles = Np // TP
    has_pix_pad = Np != N

    # ---- packed pixel slab: (B, 8, Np), fields on sublanes, pixels on lanes ----
    norm = jnp.asarray(norm_np)                                   # (B, 2) f32
    coord_h = jnp.repeat(jnp.arange(H, dtype=f32), W)             # (N,)
    coord_w = jnp.tile(jnp.arange(W, dtype=f32), H)               # (N,)
    xs = coord_h[None, :] * norm[:, 0:1]                          # (B, N)
    ys = coord_w[None, :] * norm[:, 1:2]
    p_flat = prob_map.reshape(B, N).astype(f32)
    y_flat = gt_map.reshape(B, N).astype(f32)
    pvalid = jnp.ones((B, N), f32)
    zeros = jnp.zeros((B, N), f32)
    fields = jnp.stack([xs, ys, p_flat, y_flat, pvalid, zeros, zeros, zeros],
                       axis=1)                                    # (B, 8, N)
    if has_pix_pad:
        fields = jnp.pad(fields, ((0, 0), (0, 0), (0, Np - N)))

    kernel = functools.partial(_whd_kernel, max_dist=max_dist,
                               has_pix_pad=has_pix_pad)

    out = pl.pallas_call(
        kernel,
        out_shape=jax.ShapeDtypeStruct((B, 1, 128), f32),
        grid_spec=pltpu.PrefetchScalarGridSpec(
            num_scalar_prefetch=0,
            grid=(B, n_ptiles),
            in_specs=[
                pl.BlockSpec((1, 8, TP), lambda b, t: (b, 0, t)),   # pixel slab
                pl.BlockSpec((1, Mp, 8), lambda b, t: (b, 0, 0)),   # gt slab (resident)
            ],
            out_specs=pl.BlockSpec((1, 1, 128), lambda b, t: (b, 0, 0)),
            scratch_shapes=[
                pltpu.VMEM((Mp, 1), f32),   # running min of weighted over pixels
                pltpu.VMEM((1, 1), f32),    # term1 numerator
                pltpu.VMEM((1, 1), f32),    # n_est = sum(p)
                pltpu.VMEM((1, 1), f32),    # BCE partial sum
            ],
        ),
        compiler_params=pltpu.CompilerParams(
            dimension_semantics=("parallel", "arbitrary"),
            vmem_limit_bytes=32 * 1024 * 1024,
        ),
    )(fields, jnp.asarray(gt_pack))

    t1num = out[:, 0, 0]
    n_est = out[:, 0, 1]
    bce_sums = out[:, 0, 2]
    t2num = out[:, 0, 3]
    n_gt = jnp.asarray(counts.astype(np.float32))

    term1 = t1num / (n_est + 1e-6)
    term2 = t2num / jnp.maximum(n_gt, 1.0)

    # PyTorch edge case: exactly one gt point -> terms (0, max_dist).
    term1 = jnp.where(n_gt == 1.0, 0.0, term1)
    term2 = jnp.where(n_gt == 1.0, f32(max_dist), term2)
    # TODO(synk): n_gt == 0 raises in the PyTorch reference; not handled here.

    bce = jnp.sum(bce_sums) / (B * N)
    return term1.mean() + term2.mean() + bce


def _reference(prob_map, gt_map, orig_sizes, height, width):
    """Pure-numpy replica of the PyTorch forward (for verification)."""
    prob_map = np.asarray(prob_map, np.float64)
    gt_map = np.asarray(gt_map, np.float64)
    orig_sizes = np.asarray(orig_sizes, np.float64)
    B = prob_map.shape[0]
    max_dist = math.sqrt(height ** 2 + width ** 2)
    coords = np.stack([np.repeat(np.arange(height), width),
                       np.tile(np.arange(width), height)], -1).astype(np.float64)
    t1s, t2s = [], []
    for b in range(B):
        mask = gt_map[b].reshape(-1) >= 1.0
        idx = np.nonzero(mask)[0]
        if len(idx) == 1:
            t1s.append(0.0)
            t2s.append(max_dist)
            continue
        gt_b = coords[idx]
        norm = orig_sizes[b] / np.array([height, width], np.float64)
        nx = coords * norm
        ny = gt_b * norm
        diff = np.abs(nx[:, None, :] - ny[None, :, :])
        d = np.sqrt((diff ** 2).sum(-1))
        p = prob_map[b].reshape(-1)
        t1 = (p * d.min(1)).sum() / (p.sum() + 1e-6)
        pr = p[:, None]
        wd = (1.0 - pr) * max_dist + pr * d
        t2 = wd.min(0).mean()
        t1s.append(t1)
        t2s.append(t2)
    pm = prob_map.reshape(-1)
    gm = gt_map.reshape(-1)
    logp = np.maximum(np.log(pm), -100.0)
    log1mp = np.maximum(np.log(1.0 - pm), -100.0)
    bce = -(gm * logp + (1.0 - gm) * log1mp).mean()
    return float(np.mean(t1s) + np.mean(t2s) + bce)


if __name__ == "__main__":
    B, H, W = 2, 16, 16
    key = jax.random.PRNGKey(0)
    k1, k2 = jax.random.split(key)

    prob_map = jax.nn.sigmoid(jax.random.normal(k1, (B, H, W), jnp.float32))
    u = jax.random.uniform(k2, (B, H, W), jnp.float32)
    gt_map = jnp.where(u > 0.9, jnp.float32(1.0), u * 0.9)   # ~10% gt points (== 1.0)
    orig_sizes = jnp.array([[H, W], [H, W]], dtype=jnp.int32)

    ref = _reference(prob_map, gt_map, orig_sizes, H, W)

    # Single pixel-tile path (N <= pixel_tile).
    loss1 = weighted_hausdorff_distance(prob_map, gt_map, orig_sizes,
                                        height=H, width=W)
    loss1 = jax.block_until_ready(loss1)
    np.testing.assert_allclose(float(loss1), ref, rtol=2e-4, atol=2e-4)

    # Multi-tile path (pixel axis split across 2 grid steps, scratch accumulators).
    loss2 = weighted_hausdorff_distance(prob_map, gt_map, orig_sizes,
                                        height=H, width=W, pixel_tile=128)
    loss2 = jax.block_until_ready(loss2)
    np.testing.assert_allclose(float(loss2), ref, rtol=2e-4, atol=2e-4)

    assert np.isfinite(float(loss1)) and np.isfinite(float(loss2))
    print("KERNEL_OK")
</pallas_src>

<mosaic_0001>
module attributes {stable_mosaic.version = 11 : i64} {
  func.func @_whd_kernel(%arg0: i32, %arg1: i32, %arg2: memref<1x8x256xf32, #tpu.memory_space<vmem>>, %arg3: memref<1x128x8xf32, #tpu.memory_space<vmem>>, %arg4: memref<1x1x128xf32, #tpu.memory_space<vmem>>, %arg5: memref<128x1xf32, #tpu.memory_space<vmem>>, %arg6: memref<1x1xf32, #tpu.memory_space<vmem>>, %arg7: memref<1x1xf32, #tpu.memory_space<vmem>>, %arg8: memref<1x1xf32, #tpu.memory_space<vmem>>) attributes {dimension_semantics = [#tpu.dimension_semantics<parallel>, #tpu.dimension_semantics<arbitrary>], iteration_bounds = array<i64: 2, 1>, scalar_prefetch = 0 : i64, scratch_operands = 4 : i64, tpu.core_type = #tpu.core_type<tc>, window_params = [{transform_indices = @transform_0, window_bounds = array<i64: 1, 8, 256>}, {transform_indices = @transform_1, window_bounds = array<i64: 1, 128, 8>}, {transform_indices = @transform_2, window_bounds = array<i64: 1, 1, 128>}]} {
    %c0_i32 = arith.constant 0 : i32
    %0 = arith.cmpi eq, %arg1, %c0_i32 : i32
    %1 = arith.extui %0 : i1 to i32
    %c0_i32_0 = arith.constant 0 : i32
    %2 = arith.cmpi ne, %1, %c0_i32_0 : i32
    scf.if %2 {
      %cst_35 = arith.constant 1.000000e+30 : f32
      %79 = vector.broadcast %cst_35 : f32 to vector<128x1xf32>
      %c0_36 = arith.constant 0 : index
      %c0_37 = arith.constant 0 : index
      %80 = vector.load %arg5[%c0_36, %c0_37] : memref<128x1xf32, #tpu.memory_space<vmem>>, vector<128x1xf32>
      tpu.vector_store %arg5[%c0_36, %c0_37], %79 {strides = array<i32>} : memref<128x1xf32, #tpu.memory_space<vmem>>, vector<128x1xf32>,
      %cst_38 = arith.constant 0.000000e+00 : f32
      %81 = vector.broadcast %cst_38 : f32 to vector<1x1xf32>
      %c0_39 = arith.constant 0 : index
      %c0_40 = arith.constant 0 : index
      %82 = vector.load %arg6[%c0_39, %c0_40] : memref<1x1xf32, #tpu.memory_space<vmem>>, vector<1x1xf32>
      tpu.vector_store %arg6[%c0_39, %c0_40], %81 {strides = array<i32>} : memref<1x1xf32, #tpu.memory_space<vmem>>, vector<1x1xf32>,
      %cst_41 = arith.constant 0.000000e+00 : f32
      %83 = vector.broadcast %cst_41 : f32 to vector<1x1xf32>
      %c0_42 = arith.constant 0 : index
      %c0_43 = arith.constant 0 : index
      %84 = vector.load %arg7[%c0_42, %c0_43] : memref<1x1xf32, #tpu.memory_space<vmem>>, vector<1x1xf32>
      tpu.vector_store %arg7[%c0_42, %c0_43], %83 {strides = array<i32>} : memref<1x1xf32, #tpu.memory_space<vmem>>, vector<1x1xf32>,
      %cst_44 = arith.constant 0.000000e+00 : f32
      %85 = vector.broadcast %cst_44 : f32 to vector<1x1xf32>
      %c0_45 = arith.constant 0 : index
      %c0_46 = arith.constant 0 : index
      %86 = vector.load %arg8[%c0_45, %c0_46] : memref<1x1xf32, #tpu.memory_space<vmem>>, vector<1x1xf32>
      tpu.vector_store %arg8[%c0_45, %c0_46], %85 {strides = array<i32>} : memref<1x1xf32, #tpu.memory_space<vmem>>, vector<1x1xf32>,
    } else {
    }
    %c0 = arith.constant 0 : index
    %c0_1 = arith.constant 0 : index
    %c0_2 = arith.constant 0 : index
    %3 = vector.load %arg2[%c0, %c0_1, %c0_2] : memref<1x8x256xf32, #tpu.memory_space<vmem>>, vector<1x8x256xf32>
    %4 = vector.shape_cast %3 : vector<1x8x256xf32> to vector<8x256xf32>
    %c0_3 = arith.constant 0 : index
    %c0_4 = arith.constant 0 : index
    %c0_5 = arith.constant 0 : index
    %5 = vector.load %arg3[%c0_3, %c0_4, %c0_5] : memref<1x128x8xf32, #tpu.memory_space<vmem>>, vector<1x128x8xf32>
    %6 = vector.shape_cast %5 : vector<1x128x8xf32> to vector<128x8xf32>
    %7 = vector.extract_strided_slice %4 {offsets = [0, 0], sizes = [1, 256], strides = [1, 1]} : vector<8x256xf32> to vector<1x256xf32>
    %8 = vector.extract_strided_slice %4 {offsets = [1, 0], sizes = [1, 256], strides = [1, 1]} : vector<8x256xf32> to vector<1x256xf32>
    %9 = vector.extract_strided_slice %4 {offsets = [2, 0], sizes = [1, 256], strides = [1, 1]} : vector<8x256xf32> to vector<1x256xf32>
    %10 = vector.extract_strided_slice %4 {offsets = [3, 0], sizes = [1, 256], strides = [1, 1]} : vector<8x256xf32> to vector<1x256xf32>
    %11 = vector.extract_strided_slice %6 {offsets = [0, 0], sizes = [128, 1], strides = [1, 1]} : vector<128x8xf32> to vector<128x1xf32>
    %12 = vector.extract_strided_slice %6 {offsets = [0, 1], sizes = [128, 1], strides = [1, 1]} : vector<128x8xf32> to vector<128x1xf32>
    %13 = vector.broadcast %11 : vector<128x1xf32> to vector<128x256xf32>
    %14 = vector.broadcast %7 : vector<1x256xf32> to vector<128x256xf32>
    %15 = arith.subf %13, %14 : vector<128x256xf32>
    %16 = vector.broadcast %12 : vector<128x1xf32> to vector<128x256xf32>
    %17 = vector.broadcast %8 : vector<1x256xf32> to vector<128x256xf32>
    %18 = arith.subf %16, %17 : vector<128x256xf32>
    %19 = arith.mulf %15, %15 : vector<128x256xf32>
    %20 = arith.mulf %18, %18 : vector<128x256xf32>
    %21 = arith.addf %19, %20 : vector<128x256xf32>
    %22 = math.sqrt %21 : vector<128x256xf32>
    %cst = arith.constant dense<0x7F800000> : vector<256xf32>
    %23 = vector.multi_reduction <minimumf>, %22, %cst [0] : vector<128x256xf32> to vector<256xf32>
    %24 = vector.shape_cast %23 : vector<256xf32> to vector<1x256xf32>
    %c0_6 = arith.constant 0 : index
    %c0_7 = arith.constant 0 : index
    %25 = vector.load %arg6[%c0_6, %c0_7] : memref<1x1xf32, #tpu.memory_space<vmem>>, vector<1x1xf32>
    %26 = arith.mulf %9, %24 : vector<1x256xf32>
    %27 = vector.shape_cast %26 : vector<1x256xf32> to vector<1x1x256xf32>
    %cst_8 = arith.constant dense<0.000000e+00> : vector<1xf32>
    %28 = vector.multi_reduction <add>, %27, %cst_8 [1, 2] : vector<1x1x256xf32> to vector<1xf32>
    %29 = vector.shape_cast %28 : vector<1xf32> to vector<1x1x1xf32>
    %30 = vector.extract %29[0, 0, 0] : f32 from vector<1x1x1xf32>
    %31 = vector.broadcast %30 : f32 to vector<1x1xf32>
    %32 = arith.addf %25, %31 : vector<1x1xf32>
    %c0_9 = arith.constant 0 : index
    %c0_10 = arith.constant 0 : index
    %33 = vector.load %arg6[%c0_9, %c0_10] : memref<1x1xf32, #tpu.memory_space<vmem>>, vector<1x1xf32>
    tpu.vector_store %arg6[%c0_9, %c0_10], %32 {strides = array<i32>} : memref<1x1xf32, #tpu.memory_space<vmem>>, vector<1x1xf32>,
    %c0_11 = arith.constant 0 : index
    %c0_12 = arith.constant 0 : index
    %34 = vector.load %arg7[%c0_11, %c0_12] : memref<1x1xf32, #tpu.memory_space<vmem>>, vector<1x1xf32>
    %35 = vector.shape_cast %9 : vector<1x256xf32> to vector<1x1x256xf32>
    %cst_13 = arith.constant dense<0.000000e+00> : vector<1xf32>
    %36 = vector.multi_reduction <add>, %35, %cst_13 [1, 2] : vector<1x1x256xf32> to vector<1xf32>
    %37 = vector.shape_cast %36 : vector<1xf32> to vector<1x1x1xf32>
    %38 = vector.extract %37[0, 0, 0] : f32 from vector<1x1x1xf32>
    %39 = vector.broadcast %38 : f32 to vector<1x1xf32>
    %40 = arith.addf %34, %39 : vector<1x1xf32>
    %c0_14 = arith.constant 0 : index
    %c0_15 = arith.constant 0 : index
    %41 = vector.load %arg7[%c0_14, %c0_15] : memref<1x1xf32, #tpu.memory_space<vmem>>, vector<1x1xf32>
    tpu.vector_store %arg7[%c0_14, %c0_15], %40 {strides = array<i32>} : memref<1x1xf32, #tpu.memory_space<vmem>>, vector<1x1xf32>,
    %cst_16 = arith.constant 22.6274166 : f32
    %42 = vector.broadcast %cst_16 : f32 to vector<128x256xf32>
    %43 = arith.subf %22, %42 : vector<128x256xf32>
    %44 = vector.broadcast %9 : vector<1x256xf32> to vector<128x256xf32>
    %45 = arith.mulf %44, %43 : vector<128x256xf32>
    %cst_17 = arith.constant 22.6274166 : f32
    %46 = vector.broadcast %cst_17 : f32 to vector<128x256xf32>
    %47 = arith.addf %45, %46 : vector<128x256xf32>
    %c0_18 = arith.constant 0 : index
    %c0_19 = arith.constant 0 : index
    %48 = vector.load %arg5[%c0_18, %c0_19] : memref<128x1xf32, #tpu.memory_space<vmem>>, vector<128x1xf32>
    %cst_20 = arith.constant dense<0x7F800000> : vector<128xf32>
    %49 = vector.multi_reduction <minimumf>, %47, %cst_20 [1] : vector<128x256xf32> to vector<128xf32>
    %50 = vector.shape_cast %49 : vector<128xf32> to vector<128x1xf32>
    %51 = arith.minimumf %48, %50 : vector<128x1xf32>
    %c0_21 = arith.constant 0 : index
    %c0_22 = arith.constant 0 : index
    %52 = vector.load %arg5[%c0_21, %c0_22] : memref<128x1xf32, #tpu.memory_space<vmem>>, vector<128x1xf32>
    tpu.vector_store %arg5[%c0_21, %c0_22], %51 {strides = array<i32>} : memref<128x1xf32, #tpu.memory_space<vmem>>, vector<128x1xf32>,
    %53 = math.log %9 : vector<1x256xf32>
    %cst_23 = arith.constant -1.000000e+02 : f32
    %54 = vector.broadcast %cst_23 : f32 to vector<1x256xf32>
    %55 = arith.maximumf %53, %54 : vector<1x256xf32>
    %cst_24 = arith.constant 1.000000e+00 : f32
    %56 = vector.broadcast %cst_24 : f32 to vector<1x256xf32>
    %57 = arith.subf %56, %9 : vector<1x256xf32>
    %58 = math.log %57 : vector<1x256xf32>
    %cst_25 = arith.constant -1.000000e+02 : f32
    %59 = vector.broadcast %cst_25 : f32 to vector<1x256xf32>
    %60 = arith.maximumf %58, %59 : vector<1x256xf32>
    %c0_26 = arith.constant 0 : index
    %c0_27 = arith.constant 0 : index
    %61 = vector.load %arg8[%c0_26, %c0_27] : memref<1x1xf32, #tpu.memory_space<vmem>>, vector<1x1xf32>
    %62 = arith.mulf %10, %55 : vector<1x256xf32>
    %cst_28 = arith.constant 1.000000e+00 : f32
    %63 = vector.broadcast %cst_28 : f32 to vector<1x256xf32>
    %64 = arith.subf %63, %10 : vector<1x256xf32>
    %65 = arith.mulf %64, %60 : vector<1x256xf32>
    %66 = arith.addf %62, %65 : vector<1x256xf32>
    %67 = vector.shape_cast %66 : vector<1x256xf32> to vector<1x1x256xf32>
    %cst_29 = arith.constant dense<0.000000e+00> : vector<1xf32>
    %68 = vector.multi_reduction <add>, %67, %cst_29 [1, 2] : vector<1x1x256xf32> to vector<1xf32>
    %69 = vector.shape_cast %68 : vector<1xf32> to vector<1x1x1xf32>
    %70 = vector.extract %69[0, 0, 0] : f32 from vector<1x1x1xf32>
    %71 = vector.broadcast %70 : f32 to vector<1x1xf32>
    %cst_30 = arith.constant 0.000000e+00 : f32
    %72 = vector.broadcast %cst_30 : f32 to vector<1x1xf32>
    %73 = arith.subf %72, %71 : vector<1x1xf32>
    %74 = arith.addf %61, %73 : vector<1x1xf32>
    %c0_31 = arith.constant 0 : index
    %c0_32 = arith.constant 0 : index
    %75 = vector.load %arg8[%c0_31, %c0_32] : memref<1x1xf32, #tpu.memory_space<vmem>>, vector<1x1xf32>
    tpu.vector_store %arg8[%c0_31, %c0_32], %74 {strides = array<i32>} : memref<1x1xf32, #tpu.memory_space<vmem>>, vector<1x1xf32>,
    %c0_i32_33 = arith.constant 0 : i32
    %76 = arith.cmpi eq, %arg1, %c0_i32_33 : i32
    %77 = arith.extui %76 : i1 to i32
    %c0_i32_34 = arith.constant 0 : i32
    %78 = arith.cmpi ne, %77, %c0_i32_34 : i32
    scf.if %78 {
      %79 = vector.extract_strided_slice %6 {offsets = [0, 2], sizes = [128, 1], strides = [1, 1]} : vector<128x8xf32> to vector<128x1xf32>
      %c0_35 = arith.constant 0 : index
      %c0_36 = arith.constant 0 : index
      %80 = vector.load %arg5[%c0_35, %c0_36] : memref<128x1xf32, #tpu.memory_space<vmem>>, vector<128x1xf32>
      %81 = arith.mulf %79, %80 : vector<128x1xf32>
      %82 = vector.shape_cast %81 : vector<128x1xf32> to vector<1x128x1xf32>
      %cst_37 = arith.constant dense<0.000000e+00> : vector<1xf32>
      %83 = vector.multi_reduction <add>, %82, %cst_37 [1, 2] : vector<1x128x1xf32> to vector<1xf32>
      %84 = vector.shape_cast %83 : vector<1xf32> to vector<1x1x1xf32>
      %85 = vector.extract %84[0, 0, 0] : f32 from vector<1x1x1xf32>
      %86 = vector.broadcast %85 : f32 to vector<1x1xf32>
      %87 = tpu.iota {dimensions = array<i32: 1>} : vector<1x128xi32>
      %c0_i32_38 = arith.constant 0 : i32
      %88 = vector.broadcast %c0_i32_38 : i32 to vector<1x128xi32>
      %89 = arith.cmpi eq, %87, %88 : vector<1x128xi32>
      %c0_39 = arith.constant 0 : index
      %c0_40 = arith.constant 0 : index
      %90 = vector.load %arg6[%c0_39, %c0_40] : memref<1x1xf32, #tpu.memory_space<vmem>>, vector<1x1xf32>
      %cst_41 = arith.constant 0.000000e+00 : f32
      %91 = vector.shape_cast %90 : vector<1x1xf32> to vector<1x1xf32>
      %92 = vector.broadcast %91 : vector<1x1xf32> to vector<1x128xf32>
      %93 = vector.broadcast %cst_41 : f32 to vector<1x128xf32>
      %94 = arith.select %89, %92, %93 : vector<1x128xi1>, vector<1x128xf32>
      %c1_i32 = arith.constant 1 : i32
      %95 = vector.broadcast %c1_i32 : i32 to vector<1x128xi32>
      %96 = arith.cmpi eq, %87, %95 : vector<1x128xi32>
      %c0_42 = arith.constant 0 : index
      %c0_43 = arith.constant 0 : index
      %97 = vector.load %arg7[%c0_42, %c0_43] : memref<1x1xf32, #tpu.memory_space<vmem>>, vector<1x1xf32>
      %cst_44 = arith.constant 0.000000e+00 : f32
      %98 = vector.shape_cast %97 : vector<1x1xf32> to vector<1x1xf32>
      %99 = vector.broadcast %98 : vector<1x1xf32> to vector<1x128xf32>
      %100 = vector.broadcast %cst_44 : f32 to vector<1x128xf32>
      %101 = arith.select %96, %99, %100 : vector<1x128xi1>, vector<1x128xf32>
      %102 = arith.addf %94, %101 : vector<1x128xf32>
      %c2_i32 = arith.constant 2 : i32
      %103 = vector.broadcast %c2_i32 : i32 to vector<1x128xi32>
      %104 = arith.cmpi eq, %87, %103 : vector<1x128xi32>
      %c0_45 = arith.constant 0 : index
      %c0_46 = arith.constant 0 : index
      %105 = vector.load %arg8[%c0_45, %c0_46] : memref<1x1xf32, #tpu.memory_space<vmem>>, vector<1x1xf32>
      %cst_47 = arith.constant 0.000000e+00 : f32
      %106 = vector.shape_cast %105 : vector<1x1xf32> to vector<1x1xf32>
      %107 = vector.broadcast %106 : vector<1x1xf32> to vector<1x128xf32>
      %108 = vector.broadcast %cst_47 : f32 to vector<1x128xf32>
      %109 = arith.select %104, %107, %108 : vector<1x128xi1>, vector<1x128xf32>
      %110 = arith.addf %102, %109 : vector<1x128xf32>
      %c3_i32 = arith.constant 3 : i32
      %111 = vector.broadcast %c3_i32 : i32 to vector<1x128xi32>
      %112 = arith.cmpi eq, %87, %111 : vector<1x128xi32>
      %cst_48 = arith.constant 0.000000e+00 : f32
      %113 = vector.shape_cast %86 : vector<1x1xf32> to vector<1x1xf32>
      %114 = vector.broadcast %113 : vector<1x1xf32> to vector<1x128xf32>
      %115 = vector.broadcast %cst_48 : f32 to vector<1x128xf32>
      %116 = arith.select %112, %114, %115 : vector<1x128xi1>, vector<1x128xf32>
      %117 = arith.addf %110, %116 : vector<1x128xf32>
      %c0_49 = arith.constant 0 : index
      %c0_50 = arith.constant 0 : index
      %c0_51 = arith.constant 0 : index
      %118 = vector.load %arg4[%c0_49, %c0_50, %c0_51] : memref<1x1x128xf32, #tpu.memory_space<vmem>>, vector<1x1x128xf32>
      %119 = vector.shape_cast %118 : vector<1x1x128xf32> to vector<1x128xf32>
      %120 = vector.shape_cast %117 : vector<1x128xf32> to vector<1x1x128xf32>
      tpu.vector_store %arg4[%c0_49, %c0_50, %c0_51], %120 {strides = array<i32>} : memref<1x1x128xf32, #tpu.memory_space<vmem>>, vector<1x1x128xf32>,
    } else {
    }
    return
  }
  func.func @transform_0(%arg0: i32, %arg1: i32) -> (i32, i32, i32) {
    %c0_i32 = arith.constant 0 : i32
    %c0_i32_0 = arith.constant 0 : i32
    return %arg0, %c0_i32, %arg1 : i32, i32, i32
  }
  func.func @transform_1(%arg0: i32, %arg1: i32) -> (i32, i32, i32) {
    %c0_i32 = arith.constant 0 : i32
    %c0_i32_0 = arith.constant 0 : i32
    %c0_i32_1 = arith.constant 0 : i32
    return %arg0, %c0_i32, %c0_i32_0 : i32, i32, i32
  }
  func.func @transform_2(%arg0: i32, %arg1: i32) -> (i32, i32, i32) {
    %c0_i32 = arith.constant 0 : i32
    %c0_i32_0 = arith.constant 0 : i32
    %c0_i32_1 = arith.constant 0 : i32
    return %arg0, %c0_i32, %c0_i32_0 : i32, i32, i32
  }
}

</mosaic_0001>

<llo_original>
// kernel: tpu_custom_call.1
$region0: #{tpu_custom_call.1}
  #allocation0 [shape = 'u32[]', space=smem, size = 0x4, offset = 0x4, fixed_abs, tag = 'smem constant byte address 0x4 - core index']
  #allocation1 [shape = 'u32[144,128]{1,0:T(1,128)}', space=vmem, size = 0x12000, scoped, tag = 'internal scratch']
  #allocation2 [shape = 'f32[128,1]{1,0:T(8,128)}', space=vmem, size = 0x10000, scoped, tag = 'scratch operand']
  #allocation3 [shape = 'f32[1,1]{1,0:T(1,128)}', space=vmem, size = 0x200, scoped, tag = 'scratch operand']
  #allocation4 [shape = 'f32[1,1]{1,0:T(1,128)}', space=vmem, size = 0x200, scoped, tag = 'scratch operand']
  #allocation5 [shape = 'f32[1,1]{1,0:T(1,128)}', space=vmem, size = 0x200, scoped, tag = 'scratch operand']
  %s0 = inlined_call_operand.vmem [shape: f32[2,8,256], index: 0, kind: input, shape index: {}]
  %s1 = inlined_call_operand.vmem [shape: f32[2,128,8], index: 1, kind: input, shape index: {}]
  %s2 = inlined_call_operand.hbm [shape: f32[2,1,128], index: 2, kind: output, shape index: {}]
  %s3 = sld [smem:[#allocation0]]
  $region49: #{tpu_custom_call.1} parent=0
    _
  %s5 = ssub.s32 1, %s3
  %s6 = scalar_select 0, %s5, %s3
  $region1: #{tpu_custom_call.1} parent=0
    #allocation6 [shape = 'u8[1024]{0}', space=vmem, size = 0x400, scoped, tag = 'output window, operand 0']
    #allocation7 [shape = 's32[2]{0}', space=sflag, size = 0x8, scoped, tag = 'scoped memory for tpu_custom_call.1']
    %7 = vsyncpa [#allocation7], 0
    %s8 = scalar_lea.sflag [#allocation7], 1
    %9 = vsyncpa %s8, 0
    loop: start=0, step=1, limit=4
    $region2: #{tpu_custom_call.1} parent=1 // loop_pre_header
      _
    $region3: #{tpu_custom_call.1} parent=1 // loop_header
      %s11 = sphi 0, %s15
      %p12 = scmp.ge.s32.totalorder %s11, 4
      %s18 = sphi 0, %s30
      %s19 = sphi 0, %s26
      %s20 = sphi 0, %s18
      %s21 = sphi 0, %s19
      %s22 = sphi 0, %s20
      %s23 = sphi 0, %s21
      %s35 = sphi 0, %s37
      %s38 = sphi 0, %s35
      %s39 = sphi 0, %s38
      %s55 = sphi 0, %s39
      %s61 = sphi 0, %s63
      %s64 = sphi 0, %s61
      %s65 = sphi 0, %s64
      %s81 = sphi 0, %s65
      %s87 = sphi 0, %s89
      %s90 = sphi 0, %s87
      %s91 = sphi 0, %s90
      %s107 = sphi 0, %s91
    $region4: #{tpu_custom_call.1} parent=1 // loop_header_branch
      %14 = sbr.rel (%p12) target = $region8
    $region5: #{tpu_custom_call.1} parent=1 // loop_body
      %s16 = ssub.s32 %s11, 1
      %s17 = ssub.s32 %s11, 2
      %s24 = sadd.s32 1, %s19
      %p25 = scmp.ge.s32.totalorder %s24, 1
      %s26 = scalar_select %p25, 0, %s24
      %s27 = sadd.s32 1, %s18
      %s28 = scalar_select %p25, %s27, %s18
      %p29 = scmp.ge.s32.totalorder %s28, 2
      %s30 = scalar_select %p29, 0, %s28
      %s31 = ssub.s32 %s18, %s30
      %s32 = ssub.s32 %s19, %s26
      %s33 = sor.u32 %s31, %s32
      %p34 = scmp.eq.s32.totalorder %s33, 0
      %s36 = sadd.s32 %s35, 1
      %s37 = scalar_select %p34, %s35, %s36
      %p40 = pneg %p34
      %p41 = scmp.eq.s32.totalorder %s11, 1
      %p42 = por %p40, %p41
      %p43 = scmp.ne.s32.totalorder %s35, %s38
      %p44 = scmp.eq.s32.totalorder %s11, 0
      %p45 = por %p43, %p44
      %p46 = scmp.ne.s32.totalorder %s35, %s38
      %p47 = scmp.eq.s32.totalorder %s16, 1
      %p48 = por %p46, %p47
      %p49 = scmp.ne.s32.totalorder %s38, %s39
      %p50 = scmp.eq.s32.totalorder %s16, 0
      %p51 = por %p49, %p50
      %p52 = scmp.ne.s32.totalorder %s38, %s39
      %p53 = scmp.eq.s32.totalorder %s17, 1
      %p54 = por %p52, %p53
      %p56 = scmp.ne.s32.totalorder %s39, %s55
      %p57 = scmp.eq.s32.totalorder %s17, 0
      %p58 = por %p56, %p57
      %s59 = ssub.s32 %s18, %s30
      %p60 = scmp.eq.s32.totalorder %s59, 0
      %s62 = sadd.s32 %s61, 1
      %s63 = scalar_select %p60, %s61, %s62
      %p66 = pneg %p60
      %p67 = scmp.eq.s32.totalorder %s11, 1
      %p68 = por %p66, %p67
      %p69 = scmp.ne.s32.totalorder %s61, %s64
      %p70 = scmp.eq.s32.totalorder %s11, 0
      %p71 = por %p69, %p70
      %p72 = scmp.ne.s32.totalorder %s61, %s64
      %p73 = scmp.eq.s32.totalorder %s16, 1
      %p74 = por %p72, %p73
      %p75 = scmp.ne.s32.totalorder %s64, %s65
      %p76 = scmp.eq.s32.totalorder %s16, 0
      %p77 = por %p75, %p76
      %p78 = scmp.ne.s32.totalorder %s64, %s65
      %p79 = scmp.eq.s32.totalorder %s17, 1
      %p80 = por %p78, %p79
      %p82 = scmp.ne.s32.totalorder %s65, %s81
      %p83 = scmp.eq.s32.totalorder %s17, 0
      %p84 = por %p82, %p83
      %s85 = ssub.s32 %s18, %s30
      %p86 = scmp.eq.s32.totalorder %s85, 0
      %s88 = sadd.s32 %s87, 1
      %s89 = scalar_select %p86, %s87, %s88
      %p92 = pneg %p86
      %p93 = scmp.eq.s32.totalorder %s11, 1
      %p94 = por %p92, %p93
      %p95 = scmp.ne.s32.totalorder %s87, %s90
      %p96 = scmp.eq.s32.totalorder %s11, 0
      %p97 = por %p95, %p96
      %p98 = scmp.ne.s32.totalorder %s87, %s90
      %p99 = scmp.eq.s32.totalorder %s16, 1
      %p100 = por %p98, %p99
      %p101 = scmp.ne.s32.totalorder %s90, %s91
      %p102 = scmp.eq.s32.totalorder %s16, 0
      %p103 = por %p101, %p102
      %p104 = scmp.ne.s32.totalorder %s90, %s91
      %p105 = scmp.eq.s32.totalorder %s17, 1
      %p106 = por %p104, %p105
      %p108 = scmp.ne.s32.totalorder %s91, %s107
      %p109 = scmp.eq.s32.totalorder %s17, 0
      %p110 = por %p108, %p109
      %p111 = scmp.le.s32.totalorder 1, %s11
      %p112 = scmp.lt.s32.totalorder %s11, 3
      %p113 = pnand %p111, %p112
      %p114 = pneg %p113
      // Predicated region
      $region9: #{tpu_custom_call.1} parent=5 // pred_check
        _
      $region10: #{tpu_custom_call.1} parent=5 // pred_check_branch
        %116 = sbr.rel (%p113) target = $region12
      $region11: #{tpu_custom_call.1} parent=5 // pred_region
        %s117 = ssub.s32 %s11, 1
      $region12: #{tpu_custom_call.1} parent=5 // pred_fallthru
        _
      %p118 = scmp.lt.s32.totalorder %s11, 2
      // Predicated region
      $region13: #{tpu_custom_call.1} parent=5 // pred_check
        %p119 = pneg %p118
      $region14: #{tpu_custom_call.1} parent=5 // pred_check_branch
        %121 = sbr.rel (%p119) target = $region16
      $region15: #{tpu_custom_call.1} parent=5 // pred_region
        // Predicated region
        $region17: #{tpu_custom_call.1} parent=15 // pred_check
          %p122 = pneg %p45
        $region18: #{tpu_custom_call.1} parent=15 // pred_check_branch
          %124 = sbr.rel (%p122) target = $region20
        $region19: #{tpu_custom_call.1} parent=15 // pred_region
          %s125 = smul.u32 2, %s19
          %p126 = scmp.lt.s32.totalorder %s18, 1
          %s127 = scalar_select %p126, %s18, 1
          %p128 = scmp.lt.s32.totalorder %s125, 1
          %s129 = scalar_select %p128, %s125, 1
          %s130 = smul.addr %s127, 2
          %s131 = sadd.s32 %s129, %s130
          %s132 = smul.addr %s131, 8
          %s133 = scalar_lea.vmem %s0, %s132
          %s134 = smul.u32 2, %s19
        $region20: #{tpu_custom_call.1} parent=15 // pred_fallthru
          _
        // Predicated region
        $region21: #{tpu_custom_call.1} parent=15 // pred_check
          %p135 = pneg %p71
        $region22: #{tpu_custom_call.1} parent=15 // pred_check_branch
          %137 = sbr.rel (%p135) target = $region24
        $region23: #{tpu_custom_call.1} parent=15 // pred_region
          %p138 = scmp.lt.s32.totalorder %s18, 1
          %s139 = scalar_select %p138, %s18, 1
          %s140 = smul.addr %s139, 16
          %s141 = smul.addr %s140, 8
          %s142 = scalar_lea.vmem %s1, %s141
        $region24: #{tpu_custom_call.1} parent=15 // pred_fallthru
          _
      $region16: #{tpu_custom_call.1} parent=5 // pred_fallthru
        _
      %p143 = scmp.le.s32.totalorder 1, %s11
      %p144 = scmp.lt.s32.totalorder %s11, 3
      %p145 = pnand %p143, %p144
      %p146 = pneg %p145
      // Predicated region
      $region25: #{tpu_custom_call.1} parent=5 // pred_check
        _
      $region26: #{tpu_custom_call.1} parent=5 // pred_check_branch
        %148 = sbr.rel (%p145) target = $region28
      $region27: #{tpu_custom_call.1} parent=5 // pred_region
        %s149 = ssub.s32 %s11, 1
        %s150 = smul.u32 2, %s21
        %p151 = scmp.lt.s32.totalorder %s20, 1
        %s152 = scalar_select %p151, %s20, 1
        %p153 = scmp.lt.s32.totalorder %s150, 1
        %s154 = scalar_select %p153, %s150, 1
        %s155 = smul.addr %s152, 2
        %s156 = sadd.s32 %s154, %s155
        %s157 = smul.addr %s156, 8
        %s158 = scalar_lea.vmem %s0, %s157
        %p159 = pneg %p51
        %p160 = pneg %p48
        %p161 = scmp.lt.s32.totalorder %s20, 1
        %s162 = scalar_select %p161, %s20, 1
        %s163 = smul.addr %s162, 16
        %s164 = smul.addr %s163, 8
        %s165 = scalar_lea.vmem %s1, %s164
        %p166 = pneg %p77
        %p167 = pneg %p74
        %p168 = pneg %p103
        %p169 = pneg %p100
        %s170 = sand.u32 %s90, 1
        %s171 = scalar_lea.sflag [#allocation7], %s170
        %s172 = sand.u32 %s90, 1
        %s173 = scalar_lea.vmem [#allocation6], %s172
        %s174 = smul.u32 2, %s21
        %p175 = scmp.lt.s32.totalorder %s20, 1
        %s176 = scalar_select %p175, %s20, 1
        %p177 = scmp.lt.s32.totalorder %s174, 1
        %s178 = scalar_select %p177, %s174, 1
        %s179 = smul.addr %s176, 2
        %s180 = sadd.s32 %s178, %s179
        %s181 = smul.addr %s180, 8
        %s182 = scalar_lea.vmem %s0, %s181
        %s183 = smul.u32 2, %s21
        %p184 = scmp.lt.s32.totalorder %s20, 1
        %s185 = scalar_select %p184, %s20, 1
        %s186 = smul.addr %s185, 16
        %s187 = smul.addr %s186, 8
        %s188 = scalar_lea.vmem %s1, %s187
        %p189 = scmp.eq.s32.totalorder %s21, 0
        // Predicated region
        $region29: #{tpu_custom_call.1} parent=27 // pred_check
          %p190 = pneg %p189
        $region30: #{tpu_custom_call.1} parent=27 // pred_check_branch
          %192 = sbr.rel (%p190) target = $region32
        $region31: #{tpu_custom_call.1} parent=27 // pred_region
          %vm193 = vcmask 7168
          %194 = vst.msk [vmem:[#allocation2] sm:$0xff] %vm193, 1e+30
          %195 = vst.msk [vmem:[#allocation2 + $0x8] sm:$0xff] %vm193, 1e+30
          %196 = vst.msk [vmem:[#allocation2 + $0x10] sm:$0xff] %vm193, 1e+30
          %197 = vst.msk [vmem:[#allocation2 + $0x18] sm:$0xff] %vm193, 1e+30
          %198 = vst.msk [vmem:[#allocation2 + $0x20] sm:$0xff] %vm193, 1e+30
          %199 = vst.msk [vmem:[#allocation2 + $0x28] sm:$0xff] %vm193, 1e+30
          %200 = vst.msk [vmem:[#allocation2 + $0x30] sm:$0xff] %vm193, 1e+30
          %201 = vst.msk [vmem:[#allocation2 + $0x38] sm:$0xff] %vm193, 1e+30
          %202 = vst.msk [vmem:[#allocation2 + $0x40] sm:$0xff] %vm193, 1e+30
          %203 = vst.msk [vmem:[#allocation2 + $0x48] sm:$0xff] %vm193, 1e+30
          %204 = vst.msk [vmem:[#allocation2 + $0x50] sm:$0xff] %vm193, 1e+30
          %205 = vst.msk [vmem:[#allocation2 + $0x58] sm:$0xff] %vm193, 1e+30
          %206 = vst.msk [vmem:[#allocation2 + $0x60] sm:$0xff] %vm193, 1e+30
          %207 = vst.msk [vmem:[#allocation2 + $0x68] sm:$0xff] %vm193, 1e+30
          %208 = vst.msk [vmem:[#allocation2 + $0x70] sm:$0xff] %vm193, 1e+30
          %209 = vst.msk [vmem:[#allocation2 + $0x78] sm:$0xff] %vm193, 1e+30
          %vm210 = vcmask 0
          %211 = vst.msk [vmem:[#allocation3] sm:$0x1] %vm210, 0.0
          %212 = vst.msk [vmem:[#allocation4] sm:$0x1] %vm210, 0.0
          %213 = vst.msk [vmem:[#allocation5] sm:$0x1] %vm210, 0.0
        $region32: #{tpu_custom_call.1} parent=27 // pred_fallthru
          _
        %v214 = vld [vmem:[%s182] sm:$0xff]
        %v215 = vld [vmem:[%s182 + $0x8] sm:$0xff]
        %v216 = vld [vmem:[%s188] sm:$0xff]
        %v217 = vld [vmem:[%s188 + $0x8] sm:$0xff]
        %v218 = vld [vmem:[%s188 + $0x10] sm:$0xff]
        %v219 = vld [vmem:[%s188 + $0x18] sm:$0xff]
        %v220 = vld [vmem:[%s188 + $0x20] sm:$0xff]
        %v221 = vld [vmem:[%s188 + $0x28] sm:$0xff]
        %v222 = vld [vmem:[%s188 + $0x30] sm:$0xff]
        %v223 = vld [vmem:[%s188 + $0x38] sm:$0xff]
        %v224 = vld [vmem:[%s188 + $0x40] sm:$0xff]
        %v225 = vld [vmem:[%s188 + $0x48] sm:$0xff]
        %v226 = vld [vmem:[%s188 + $0x50] sm:$0xff]
        %v227 = vld [vmem:[%s188 + $0x58] sm:$0xff]
        %v228 = vld [vmem:[%s188 + $0x60] sm:$0xff]
        %v229 = vld [vmem:[%s188 + $0x68] sm:$0xff]
        %v230 = vld [vmem:[%s188 + $0x70] sm:$0xff]
        %v231 = vld [vmem:[%s188 + $0x78] sm:$0xff]
        %233 = vset.pattern.permute.xlu0 0
        %234 = vperm.xlu0 %233, %v216
        %v235 = vpop.permute.xlu0 %234
        %238 = vset.pattern.permute.xlu0 0
        %239 = vperm.xlu0 %238, %v217
        %v240 = vpop.permute.xlu0 %239
        %243 = vset.pattern.permute.xlu0 0
        %244 = vperm.xlu0 %243, %v218
        %v245 = vpop.permute.xlu0 %244
        %248 = vset.pattern.permute.xlu0 0
        %249 = vperm.xlu0 %248, %v219
        %v250 = vpop.permute.xlu0 %249
        %253 = vset.pattern.permute.xlu0 0
        %254 = vperm.xlu0 %253, %v220
        %v255 = vpop.permute.xlu0 %254
        %258 = vset.pattern.permute.xlu0 0
        %259 = vperm.xlu0 %258, %v221
        %v260 = vpop.permute.xlu0 %259
        %263 = vset.pattern.permute.xlu0 0
        %264 = vperm.xlu0 %263, %v222
        %v265 = vpop.permute.xlu0 %264
        %268 = vset.pattern.permute.xlu0 0
        %269 = vperm.xlu0 %268, %v223
        %v270 = vpop.permute.xlu0 %269
        %273 = vset.pattern.permute.xlu0 0
        %274 = vperm.xlu0 %273, %v224
        %v275 = vpop.permute.xlu0 %274
        %278 = vset.pattern.permute.xlu0 0
        %279 = vperm.xlu0 %278, %v225
        %v280 = vpop.permute.xlu0 %279
        %283 = vset.pattern.permute.xlu0 0
        %284 = vperm.xlu0 %283, %v226
        %v285 = vpop.permute.xlu0 %284
        %288 = vset.pattern.permute.xlu0 0
        %289 = vperm.xlu0 %288, %v227
        %v290 = vpop.permute.xlu0 %289
        %293 = vset.pattern.permute.xlu0 0
        %294 = vperm.xlu0 %293, %v228
        %v295 = vpop.permute.xlu0 %294
        %298 = vset.pattern.permute.xlu0 0
        %299 = vperm.xlu0 %298, %v229
        %v300 = vpop.permute.xlu0 %299
        %303 = vset.pattern.permute.xlu0 0
        %304 = vperm.xlu0 %303, %v230
        %v305 = vpop.permute.xlu0 %304
        %308 = vset.pattern.permute.xlu0 0
        %309 = vperm.xlu0 %308, %v231
        %v310 = vpop.permute.xlu0 %309
        %v312 = vlaneseq
        %v313 = vshrl.u32 %v312, 7
        %v314 = vsub.s32 0, %v313
        %v315 = vrot.slane %v214, %v314
        %v316 = vlaneseq
        %v317 = vshrl.u32 %v316, 7
        %v318 = vsub.s32 0, %v317
        %v319 = vrot.slane %v215, %v318
        %v320 = vsub.f32 %v235, %v315
        %v321 = vsub.f32 %v235, %v319
        %v322 = vsub.f32 %v240, %v315
        %v323 = vsub.f32 %v240, %v319
        %v324 = vsub.f32 %v245, %v315
        %v325 = vsub.f32 %v245, %v319
        %v326 = vsub.f32 %v250, %v315
        %v327 = vsub.f32 %v250, %v319
        %v328 = vsub.f32 %v255, %v315
        %v329 = vsub.f32 %v255, %v319
        %v330 = vsub.f32 %v260, %v315
        %v331 = vsub.f32 %v260, %v319
        %v332 = vsub.f32 %v265, %v315
        %v333 = vsub.f32 %v265, %v319
        %v334 = vsub.f32 %v270, %v315
        %v335 = vsub.f32 %v270, %v319
        %v336 = vsub.f32 %v275, %v315
        %v337 = vsub.f32 %v275, %v319
        %v338 = vsub.f32 %v280, %v315
        %v339 = vsub.f32 %v280, %v319
        %v340 = vsub.f32 %v285, %v315
        %v341 = vsub.f32 %v285, %v319
        %v342 = vsub.f32 %v290, %v315
        %v343 = vsub.f32 %v290, %v319
        %v344 = vsub.f32 %v295, %v315
        %v345 = vsub.f32 %v295, %v319
        %v346 = vsub.f32 %v300, %v315
        %v347 = vsub.f32 %v300, %v319
        %v348 = vsub.f32 %v305, %v315
        %v349 = vsub.f32 %v305, %v319
        %v350 = vsub.f32 %v310, %v315
        %v351 = vsub.f32 %v310, %v319
        %352 = vset.pattern.permute.xlu0 1
        %353 = vperm.xlu0 %352, %v216
        %v354 = vpop.permute.xlu0 %353
        %356 = vset.pattern.permute.xlu0 1
        %357 = vperm.xlu0 %356, %v217
        %v358 = vpop.permute.xlu0 %357
        %360 = vset.pattern.permute.xlu0 1
        %361 = vperm.xlu0 %360, %v218
        %v362 = vpop.permute.xlu0 %361
        %364 = vset.pattern.permute.xlu0 1
        %365 = vperm.xlu0 %364, %v219
        %v366 = vpop.permute.xlu0 %365
        %368 = vset.pattern.permute.xlu0 1
        %369 = vperm.xlu0 %368, %v220
        %v370 = vpop.permute.xlu0 %369
        %372 = vset.pattern.permute.xlu0 1
        %373 = vperm.xlu0 %372, %v221
        %v374 = vpop.permute.xlu0 %373
        %376 = vset.pattern.permute.xlu0 1
        %377 = vperm.xlu0 %376, %v222
        %v378 = vpop.permute.xlu0 %377
        %380 = vset.pattern.permute.xlu0 1
        %381 = vperm.xlu0 %380, %v223
        %v382 = vpop.permute.xlu0 %381
        %384 = vset.pattern.permute.xlu0 1
        %385 = vperm.xlu0 %384, %v224
        %v386 = vpop.permute.xlu0 %385
        %388 = vset.pattern.permute.xlu0 1
        %389 = vperm.xlu0 %388, %v225
        %v390 = vpop.permute.xlu0 %389
        %392 = vset.pattern.permute.xlu0 1
        %393 = vperm.xlu0 %392, %v226
        %v394 = vpop.permute.xlu0 %393
        %396 = vset.pattern.permute.xlu0 1
        %397 = vperm.xlu0 %396, %v227
        %v398 = vpop.permute.xlu0 %397
        %400 = vset.pattern.permute.xlu0 1
        %401 = vperm.xlu0 %400, %v228
        %v402 = vpop.permute.xlu0 %401
        %404 = vset.pattern.permute.xlu0 1
        %405 = vperm.xlu0 %404, %v229
        %v406 = vpop.permute.xlu0 %405
        %408 = vset.pattern.permute.xlu0 1
        %409 = vperm.xlu0 %408, %v230
        %v410 = vpop.permute.xlu0 %409
        %412 = vset.pattern.permute.xlu0 1
        %413 = vperm.xlu0 %412, %v231
        %v414 = vpop.permute.xlu0 %413
        %v416 = vlaneseq
        %v417 = vshrl.u32 %v416, 7
        %v418 = vsub.s32 1, %v417
        %v419 = vrot.slane %v214, %v418
        %v420 = vlaneseq
        %v421 = vshrl.u32 %v420, 7
        %v422 = vsub.s32 1, %v421
        %v423 = vrot.slane %v215, %v422
        %v424 = vsub.f32 %v354, %v419
        %v425 = vsub.f32 %v354, %v423
        %v426 = vsub.f32 %v358, %v419
        %v427 = vsub.f32 %v358, %v423
        %v428 = vsub.f32 %v362, %v419
        %v429 = vsub.f32 %v362, %v423
        %v430 = vsub.f32 %v366, %v419
        %v431 = vsub.f32 %v366, %v423
        %v432 = vsub.f32 %v370, %v419
        %v433 = vsub.f32 %v370, %v423
        %v434 = vsub.f32 %v374, %v419
        %v435 = vsub.f32 %v374, %v423
        %v436 = vsub.f32 %v378, %v419
        %v437 = vsub.f32 %v378, %v423
        %v438 = vsub.f32 %v382, %v419
        %v439 = vsub.f32 %v382, %v423
        %v440 = vsub.f32 %v386, %v419
        %v441 = vsub.f32 %v386, %v423
        %v442 = vsub.f32 %v390, %v419
        %v443 = vsub.f32 %v390, %v423
        %v444 = vsub.f32 %v394, %v419
        %v445 = vsub.f32 %v394, %v423
        %v446 = vsub.f32 %v398, %v419
        %v447 = vsub.f32 %v398, %v423
        %v448 = vsub.f32 %v402, %v419
        %v449 = vsub.f32 %v402, %v423
        %v450 = vsub.f32 %v406, %v419
        %v451 = vsub.f32 %v406, %v423
        %v452 = vsub.f32 %v410, %v419
        %v453 = vsub.f32 %v410, %v423
        %v454 = vsub.f32 %v414, %v419
        %v455 = vsub.f32 %v414, %v423
        %v456 = vmul.f32 %v320, %v320
        %v457 = vmul.f32 %v321, %v321
        %v458 = vmul.f32 %v322, %v322
        %v459 = vmul.f32 %v323, %v323
        %v460 = vmul.f32 %v324, %v324
        %v461 = vmul.f32 %v325, %v325
        %v462 = vmul.f32 %v326, %v326
        %v463 = vmul.f32 %v327, %v327
        %v464 = vmul.f32 %v328, %v328
        %v465 = vmul.f32 %v329, %v329
        %v466 = vmul.f32 %v330, %v330
        %v467 = vmul.f32 %v331, %v331
        %v468 = vmul.f32 %v332, %v332
        %v469 = vmul.f32 %v333, %v333
        %v470 = vmul.f32 %v334, %v334
        %v471 = vmul.f32 %v335, %v335
        %v472 = vmul.f32 %v336, %v336
        %v473 = vmul.f32 %v337, %v337
        %v474 = vmul.f32 %v338, %v338
        %v475 = vmul.f32 %v339, %v339
        %v476 = vmul.f32 %v340, %v340
        %v477 = vmul.f32 %v341, %v341
        %v478 = vmul.f32 %v342, %v342
        %v479 = vmul.f32 %v343, %v343
        %v480 = vmul.f32 %v344, %v344
        %v481 = vmul.f32 %v345, %v345
        %v482 = vmul.f32 %v346, %v346
        %v483 = vmul.f32 %v347, %v347
        %v484 = vmul.f32 %v348, %v348
        %v485 = vmul.f32 %v349, %v349
        %v486 = vmul.f32 %v350, %v350
        %v487 = vmul.f32 %v351, %v351
        %v488 = vmul.f32 %v424, %v424
        %v489 = vmul.f32 %v425, %v425
        %v490 = vmul.f32 %v426, %v426
        %v491 = vmul.f32 %v427, %v427
        %v492 = vmul.f32 %v428, %v428
        %v493 = vmul.f32 %v429, %v429
        %v494 = vmul.f32 %v430, %v430
        %v495 = vmul.f32 %v431, %v431
        %v496 = vmul.f32 %v432, %v432
        %v497 = vmul.f32 %v433, %v433
        %v498 = vmul.f32 %v434, %v434
        %v499 = vmul.f32 %v435, %v435
        %v500 = vmul.f32 %v436, %v436
        %v501 = vmul.f32 %v437, %v437
        %v502 = vmul.f32 %v438, %v438
        %v503 = vmul.f32 %v439, %v439
        %v504 = vmul.f32 %v440, %v440
        %v505 = vmul.f32 %v441, %v441
        %v506 = vmul.f32 %v442, %v442
        %v507 = vmul.f32 %v443, %v443
        %v508 = vmul.f32 %v444, %v444
        %v509 = vmul.f32 %v445, %v445
        %v510 = vmul.f32 %v446, %v446
        %v511 = vmul.f32 %v447, %v447
        %v512 = vmul.f32 %v448, %v448
        %v513 = vmul.f32 %v449, %v449
        %v514 = vmul.f32 %v450, %v450
        %v515 = vmul.f32 %v451, %v451
        %v516 = vmul.f32 %v452, %v452
        %v517 = vmul.f32 %v453, %v453
        %v518 = vmul.f32 %v454, %v454
        %v519 = vmul.f32 %v455, %v455
        %v520 = vadd.f32 %v456, %v488
        %v521 = vadd.f32 %v457, %v489
        %v522 = vadd.f32 %v458, %v490
        %v523 = vadd.f32 %v459, %v491
        %v524 = vadd.f32 %v460, %v492
        %v525 = vadd.f32 %v461, %v493
        %v526 = vadd.f32 %v462, %v494
        %v527 = vadd.f32 %v463, %v495
        %v528 = vadd.f32 %v464, %v496
        %v529 = vadd.f32 %v465, %v497
        %v530 = vadd.f32 %v466, %v498
        %v531 = vadd.f32 %v467, %v499
        %v532 = vadd.f32 %v468, %v500
        %v533 = vadd.f32 %v469, %v501
        %v534 = vadd.f32 %v470, %v502
        %v535 = vadd.f32 %v471, %v503
        %v536 = vadd.f32 %v472, %v504
        %v537 = vadd.f32 %v473, %v505
        %v538 = vadd.f32 %v474, %v506
        %v539 = vadd.f32 %v475, %v507
        %v540 = vadd.f32 %v476, %v508
        %v541 = vadd.f32 %v477, %v509
        %v542 = vadd.f32 %v478, %v510
        %v543 = vadd.f32 %v479, %v511
        %v544 = vadd.f32 %v480, %v512
        %v545 = vadd.f32 %v481, %v513
        %v546 = vadd.f32 %v482, %v514
        %v547 = vadd.f32 %v483, %v515
        %v548 = vadd.f32 %v484, %v516
        %v549 = vadd.f32 %v485, %v517
        %v550 = vadd.f32 %v486, %v518
        %v551 = vadd.f32 %v487, %v519
        %v552 = vrsqrt.pop %v520
        %v553 = vmul.f32 %v520, %v552
        %vm554 = vcmp.eq.f32.partialorder %v520, inf
        %v555 = vsel %vm554, %v520, %v553
        %vm556 = vcmp.eq.f32.partialorder %v520, 0.0
        %v557 = vand.u32 %v520, 2147483648
        %v558 = vsel %vm556, %v557, %v555
        %v559 = vrsqrt.pop %v521
        %v560 = vmul.f32 %v521, %v559
        %vm561 = vcmp.eq.f32.partialorder %v521, inf
        %v562 = vsel %vm561, %v521, %v560
        %vm563 = vcmp.eq.f32.partialorder %v521, 0.0
        %v564 = vand.u32 %v521, 2147483648
        %v565 = vsel %vm563, %v564, %v562
        %v566 = vrsqrt.pop %v522
        %v567 = vmul.f32 %v522, %v566
        %vm568 = vcmp.eq.f32.partialorder %v522, inf
        %v569 = vsel %vm568, %v522, %v567
        %vm570 = vcmp.eq.f32.partialorder %v522, 0.0
        %v571 = vand.u32 %v522, 2147483648
        %v572 = vsel %vm570, %v571, %v569
        %v573 = vrsqrt.pop %v523
        %v574 = vmul.f32 %v523, %v573
        %vm575 = vcmp.eq.f32.partialorder %v523, inf
        %v576 = vsel %vm575, %v523, %v574
        %vm577 = vcmp.eq.f32.partialorder %v523, 0.0
        %v578 = vand.u32 %v523, 2147483648
        %v579 = vsel %vm577, %v578, %v576
        %v580 = vrsqrt.pop %v524
        %v581 = vmul.f32 %v524, %v580
        %vm582 = vcmp.eq.f32.partialorder %v524, inf
        %v583 = vsel %vm582, %v524, %v581
        %vm584 = vcmp.eq.f32.partialorder %v524, 0.0
        %v585 = vand.u32 %v524, 2147483648
        %v586 = vsel %vm584, %v585, %v583
        %v587 = vrsqrt.pop %v525
        %v588 = vmul.f32 %v525, %v587
        %vm589 = vcmp.eq.f32.partialorder %v525, inf
        %v590 = vsel %vm589, %v525, %v588
        %vm591 = vcmp.eq.f32.partialorder %v525, 0.0
        %v592 = vand.u32 %v525, 2147483648
        %v593 = vsel %vm591, %v592, %v590
        %v594 = vrsqrt.pop %v526
        %v595 = vmul.f32 %v526, %v594
        %vm596 = vcmp.eq.f32.partialorder %v526, inf
        %v597 = vsel %vm596, %v526, %v595
        %vm598 = vcmp.eq.f32.partialorder %v526, 0.0
        %v599 = vand.u32 %v526, 2147483648
        %v600 = vsel %vm598, %v599, %v597
        %v601 = vrsqrt.pop %v527
        %v602 = vmul.f32 %v527, %v601
        %vm603 = vcmp.eq.f32.partialorder %v527, inf
        %v604 = vsel %vm603, %v527, %v602
        %vm605 = vcmp.eq.f32.partialorder %v527, 0.0
        %v606 = vand.u32 %v527, 2147483648
        %v607 = vsel %vm605, %v606, %v604
        %v608 = vrsqrt.pop %v528
        %v609 = vmul.f32 %v528, %v608
        %vm610 = vcmp.eq.f32.partialorder %v528, inf
        %v611 = vsel %vm610, %v528, %v609
        %vm612 = vcmp.eq.f32.partialorder %v528, 0.0
        %v613 = vand.u32 %v528, 2147483648
        %v614 = vsel %vm612, %v613, %v611
        %v615 = vrsqrt.pop %v529
        %v616 = vmul.f32 %v529, %v615
        %vm617 = vcmp.eq.f32.partialorder %v529, inf
        %v618 = vsel %vm617, %v529, %v616
        %vm619 = vcmp.eq.f32.partialorder %v529, 0.0
        %v620 = vand.u32 %v529, 2147483648
        %v621 = vsel %vm619, %v620, %v618
        %v622 = vrsqrt.pop %v530
        %v623 = vmul.f32 %v530, %v622
        %vm624 = vcmp.eq.f32.partialorder %v530, inf
        %v625 = vsel %vm624, %v530, %v623
        %vm626 = vcmp.eq.f32.partialorder %v530, 0.0
        %v627 = vand.u32 %v530, 2147483648
        %v628 = vsel %vm626, %v627, %v625
        %v629 = vrsqrt.pop %v531
        %v630 = vmul.f32 %v531, %v629
        %vm631 = vcmp.eq.f32.partialorder %v531, inf
        %v632 = vsel %vm631, %v531, %v630
        %vm633 = vcmp.eq.f32.partialorder %v531, 0.0
        %v634 = vand.u32 %v531, 2147483648
        %v635 = vsel %vm633, %v634, %v632
        %v636 = vrsqrt.pop %v532
        %v637 = vmul.f32 %v532, %v636
        %vm638 = vcmp.eq.f32.partialorder %v532, inf
        %v639 = vsel %vm638, %v532, %v637
        %vm640 = vcmp.eq.f32.partialorder %v532, 0.0
        %v641 = vand.u32 %v532, 2147483648
        %v642 = vsel %vm640, %v641, %v639
        %v643 = vrsqrt.pop %v533
        %v644 = vmul.f32 %v533, %v643
        %vm645 = vcmp.eq.f32.partialorder %v533, inf
        %v646 = vsel %vm645, %v533, %v644
        %vm647 = vcmp.eq.f32.partialorder %v533, 0.0
        %v648 = vand.u32 %v533, 2147483648
        %v649 = vsel %vm647, %v648, %v646
        %v650 = vrsqrt.pop %v534
        %v651 = vmul.f32 %v534, %v650
        %vm652 = vcmp.eq.f32.partialorder %v534, inf
        %v653 = vsel %vm652, %v534, %v651
        %vm654 = vcmp.eq.f32.partialorder %v534, 0.0
        %v655 = vand.u32 %v534, 2147483648
        %v656 = vsel %vm654, %v655, %v653
        %v657 = vrsqrt.pop %v535
        %v658 = vmul.f32 %v535, %v657
        %vm659 = vcmp.eq.f32.partialorder %v535, inf
        %v660 = vsel %vm659, %v535, %v658
        %vm661 = vcmp.eq.f32.partialorder %v535, 0.0
        %v662 = vand.u32 %v535, 2147483648
        %v663 = vsel %vm661, %v662, %v660
        %v664 = vrsqrt.pop %v536
        %v665 = vmul.f32 %v536, %v664
        %vm666 = vcmp.eq.f32.partialorder %v536, inf
        %v667 = vsel %vm666, %v536, %v665
        %vm668 = vcmp.eq.f32.partialorder %v536, 0.0
        %v669 = vand.u32 %v536, 2147483648
        %v670 = vsel %vm668, %v669, %v667
        %v671 = vrsqrt.pop %v537
        %v672 = vmul.f32 %v537, %v671
        %vm673 = vcmp.eq.f32.partialorder %v537, inf
        %v674 = vsel %vm673, %v537, %v672
        %vm675 = vcmp.eq.f32.partialorder %v537, 0.0
        %v676 = vand.u32 %v537, 2147483648
        %v677 = vsel %vm675, %v676, %v674
        %v678 = vrsqrt.pop %v538
        %v679 = vmul.f32 %v538, %v678
        %vm680 = vcmp.eq.f32.partialorder %v538, inf
        %v681 = vsel %vm680, %v538, %v679
        %vm682 = vcmp.eq.f32.partialorder %v538, 0.0
        %v683 = vand.u32 %v538, 2147483648
        %v684 = vsel %vm682, %v683, %v681
        %v685 = vrsqrt.pop %v539
        %v686 = vmul.f32 %v539, %v685
        %vm687 = vcmp.eq.f32.partialorder %v539, inf
        %v688 = vsel %vm687, %v539, %v686
        %vm689 = vcmp.eq.f32.partialorder %v539, 0.0
        %v690 = vand.u32 %v539, 2147483648
        %v691 = vsel %vm689, %v690, %v688
        %v692 = vrsqrt.pop %v540
        %v693 = vmul.f32 %v540, %v692
        %vm694 = vcmp.eq.f32.partialorder %v540, inf
        %v695 = vsel %vm694, %v540, %v693
        %vm696 = vcmp.eq.f32.partialorder %v540, 0.0
        %v697 = vand.u32 %v540, 2147483648
        %v698 = vsel %vm696, %v697, %v695
        %v699 = vrsqrt.pop %v541
        %v700 = vmul.f32 %v541, %v699
        %vm701 = vcmp.eq.f32.partialorder %v541, inf
        %v702 = vsel %vm701, %v541, %v700
        %vm703 = vcmp.eq.f32.partialorder %v541, 0.0
        %v704 = vand.u32 %v541, 2147483648
        %v705 = vsel %vm703, %v704, %v702
        %v706 = vrsqrt.pop %v542
        %v707 = vmul.f32 %v542, %v706
        %vm708 = vcmp.eq.f32.partialorder %v542, inf
        %v709 = vsel %vm708, %v542, %v707
        %vm710 = vcmp.eq.f32.partialorder %v542, 0.0
        %v711 = vand.u32 %v542, 2147483648
        %v712 = vsel %vm710, %v711, %v709
        %v713 = vrsqrt.pop %v543
        %v714 = vmul.f32 %v543, %v713
        %vm715 = vcmp.eq.f32.partialorder %v543, inf
        %v716 = vsel %vm715, %v543, %v714
        %vm717 = vcmp.eq.f32.partialorder %v543, 0.0
        %v718 = vand.u32 %v543, 2147483648
        %v719 = vsel %vm717, %v718, %v716
        %v720 = vrsqrt.pop %v544
        %v721 = vmul.f32 %v544, %v720
        %vm722 = vcmp.eq.f32.partialorder %v544, inf
        %v723 = vsel %vm722, %v544, %v721
        %vm724 = vcmp.eq.f32.partialorder %v544, 0.0
        %v725 = vand.u32 %v544, 2147483648
        %v726 = vsel %vm724, %v725, %v723
        %v727 = vrsqrt.pop %v545
        %v728 = vmul.f32 %v545, %v727
        %vm729 = vcmp.eq.f32.partialorder %v545, inf
        %v730 = vsel %vm729, %v545, %v728
        %vm731 = vcmp.eq.f32.partialorder %v545, 0.0
        %v732 = vand.u32 %v545, 2147483648
        %v733 = vsel %vm731, %v732, %v730
        %v734 = vrsqrt.pop %v546
        %v735 = vmul.f32 %v546, %v734
        %vm736 = vcmp.eq.f32.partialorder %v546, inf
        %v737 = vsel %vm736, %v546, %v735
        %vm738 = vcmp.eq.f32.partialorder %v546, 0.0
        %v739 = vand.u32 %v546, 2147483648
        %v740 = vsel %vm738, %v739, %v737
        %v741 = vrsqrt.pop %v547
        %v742 = vmul.f32 %v547, %v741
        %vm743 = vcmp.eq.f32.partialorder %v547, inf
        %v744 = vsel %vm743, %v547, %v742
        %vm745 = vcmp.eq.f32.partialorder %v547, 0.0
        %v746 = vand.u32 %v547, 2147483648
        %v747 = vsel %vm745, %v746, %v744
        %v748 = vrsqrt.pop %v548
        %v749 = vmul.f32 %v548, %v748
        %vm750 = vcmp.eq.f32.partialorder %v548, inf
        %v751 = vsel %vm750, %v548, %v749
        %vm752 = vcmp.eq.f32.partialorder %v548, 0.0
        %v753 = vand.u32 %v548, 2147483648
        %v754 = vsel %vm752, %v753, %v751
        %v755 = vrsqrt.pop %v549
        %v756 = vmul.f32 %v549, %v755
        %vm757 = vcmp.eq.f32.partialorder %v549, inf
        %v758 = vsel %vm757, %v549, %v756
        %vm759 = vcmp.eq.f32.partialorder %v549, 0.0
        %v760 = vand.u32 %v549, 2147483648
        %v761 = vsel %vm759, %v760, %v758
        %v762 = vrsqrt.pop %v550
        %v763 = vmul.f32 %v550, %v762
        %vm764 = vcmp.eq.f32.partialorder %v550, inf
        %v765 = vsel %vm764, %v550, %v763
        %vm766 = vcmp.eq.f32.partialorder %v550, 0.0
        %v767 = vand.u32 %v550, 2147483648
        %v768 = vsel %vm766, %v767, %v765
        %v769 = vrsqrt.pop %v551
        %v770 = vmul.f32 %v551, %v769
        %vm771 = vcmp.eq.f32.partialorder %v551, inf
        %v772 = vsel %vm771, %v551, %v770
        %vm773 = vcmp.eq.f32.partialorder %v551, 0.0
        %v774 = vand.u32 %v551, 2147483648
        %v775 = vsel %vm773, %v774, %v772
        %v776 = vmin.f32 %v558, %v586
        %v777 = vmin.f32 %v572, %v600
        %v778 = vmin.f32 %v776, %v614
        %v779 = vmin.f32 %v777, %v628
        %v780 = vmin.f32 %v778, %v642
        %v781 = vmin.f32 %v779, %v656
        %v782 = vmin.f32 %v780, %v670
        %v783 = vmin.f32 %v781, %v684
        %v784 = vmin.f32 %v782, %v698
        %v785 = vmin.f32 %v783, %v712
        %v786 = vmin.f32 %v784, %v726
        %v787 = vmin.f32 %v785, %v740
        %v788 = vmin.f32 %v786, %v754
        %v789 = vmin.f32 %v787, %v768
        %v790 = vmin.f32 %v788, %v789
        %v791 = vrot.slane %v790, 4
        %v792 = vmin.f32 %v790, %v791
        %v793 = vrot.slane %v792, 2
        %v794 = vmin.f32 %v792, %v793
        %v795 = vrot.slane %v794, 1
        %v796 = vmin.f32 %v794, %v795
        %v797 = vmin.f32 %v565, %v593
        %v798 = vmin.f32 %v579, %v607
        %v799 = vmin.f32 %v797, %v621
        %v800 = vmin.f32 %v798, %v635
        %v801 = vmin.f32 %v799, %v649
        %v802 = vmin.f32 %v800, %v663
        %v803 = vmin.f32 %v801, %v677
        %v804 = vmin.f32 %v802, %v691
        %v805 = vmin.f32 %v803, %v705
        %v806 = vmin.f32 %v804, %v719
        %v807 = vmin.f32 %v805, %v733
        %v808 = vmin.f32 %v806, %v747
        %v809 = vmin.f32 %v807, %v761
        %v810 = vmin.f32 %v808, %v775
        %v811 = vmin.f32 %v809, %v810
        %v812 = vrot.slane %v811, 4
        %v813 = vmin.f32 %v811, %v812
        %v814 = vrot.slane %v813, 2
        %v815 = vmin.f32 %v813, %v814
        %v816 = vrot.slane %v815, 1
        %v817 = vmin.f32 %v815, %v816
        %v818 = vld [vmem:[#allocation3] sm:$0x1]
        %v819 = vmul.f32 %v214, %v796
        %v820 = vmul.f32 %v215, %v817
        %v823 = vrot.slane %v819, 2
        %v824 = vrot.slane %v820, 2
        %vm827 = vcmask 1040384
        %v828 = vsel %vm827, %v823, 0.0
        %v829 = vsel %vm827, %v824, 0.0
        %v830 = vadd.f32 %v828, %v829
        %831 = vadd.xlane.f32.xlu0 %v830
        %v832 = vpop.xlane.xlu0 %831
        %v833 = vrot.slane %v832, 4
        %v834 = vadd.f32 %v832, %v833
        %v835 = vrot.slane %v834, 2
        %v836 = vadd.f32 %v834, %v835
        %v837 = vrot.slane %v836, 1
        %v838 = vadd.f32 %v836, %v837
        %s839 = vtos %v838
        %v840 = vstv %s839
        %v841 = vadd.f32 %v818, %v840
        %vm842 = vcmask 0
        %843 = vst.msk [vmem:[#allocation3] sm:$0x1] %vm842, %v841
        %v844 = vld [vmem:[#allocation4] sm:$0x1]
        %v847 = vrot.slane %v214, 2
        %v848 = vrot.slane %v215, 2
        %v851 = vsel %vm827, %v847, 0.0
        %v852 = vsel %vm827, %v848, 0.0
        %v853 = vadd.f32 %v851, %v852
        %854 = vadd.xlane.f32.xlu0 %v853
        %v855 = vpop.xlane.xlu0 %854
        %v856 = vrot.slane %v855, 4
        %v857 = vadd.f32 %v855, %v856
        %v858 = vrot.slane %v857, 2
        %v859 = vadd.f32 %v857, %v858
        %v860 = vrot.slane %v859, 1
        %v861 = vadd.f32 %v859, %v860
        %s862 = vtos %v861
        %v863 = vstv %s862
        %v864 = vadd.f32 %v844, %v863
        %865 = vst.msk [vmem:[#allocation4] sm:$0x1] %vm842, %v864
        %v866 = vsub.f32 %v558, 22.627417
        %v867 = vsub.f32 %v565, 22.627417
        %v868 = vsub.f32 %v572, 22.627417
        %v869 = vsub.f32 %v579, 22.627417
        %v870 = vsub.f32 %v586, 22.627417
        %v871 = vsub.f32 %v593, 22.627417
        %v872 = vsub.f32 %v600, 22.627417
        %v873 = vsub.f32 %v607, 22.627417
        %v874 = vsub.f32 %v614, 22.627417
        %v875 = vsub.f32 %v621, 22.627417
        %v876 = vsub.f32 %v628, 22.627417
        %v877 = vsub.f32 %v635, 22.627417
        %v878 = vsub.f32 %v642, 22.627417
        %v879 = vsub.f32 %v649, 22.627417
        %v880 = vsub.f32 %v656, 22.627417
        %v881 = vsub.f32 %v663, 22.627417
        %v882 = vsub.f32 %v670, 22.627417
        %v883 = vsub.f32 %v677, 22.627417
        %v884 = vsub.f32 %v684, 22.627417
        %v885 = vsub.f32 %v691, 22.627417
        %v886 = vsub.f32 %v698, 22.627417
        %v887 = vsub.f32 %v705, 22.627417
        %v888 = vsub.f32 %v712, 22.627417
        %v889 = vsub.f32 %v719, 22.627417
        %v890 = vsub.f32 %v726, 22.627417
        %v891 = vsub.f32 %v733, 22.627417
        %v892 = vsub.f32 %v740, 22.627417
        %v893 = vsub.f32 %v747, 22.627417
        %v894 = vsub.f32 %v754, 22.627417
        %v895 = vsub.f32 %v761, 22.627417
        %v896 = vsub.f32 %v768, 22.627417
        %v897 = vsub.f32 %v775, 22.627417
        %v898 = vlaneseq
        %v899 = vshrl.u32 %v898, 7
        %v900 = vsub.s32 2, %v899
        %v901 = vrot.slane %v214, %v900
        %v902 = vlaneseq
        %v903 = vshrl.u32 %v902, 7
        %v904 = vsub.s32 2, %v903
        %v905 = vrot.slane %v215, %v904
        %v906 = vmul.f32 %v901, %v866
        %v907 = vmul.f32 %v905, %v867
        %v908 = vmul.f32 %v901, %v868
        %v909 = vmul.f32 %v905, %v869
        %v910 = vmul.f32 %v901, %v870
        %v911 = vmul.f32 %v905, %v871
        %v912 = vmul.f32 %v901, %v872
        %v913 = vmul.f32 %v905, %v873
        %v914 = vmul.f32 %v901, %v874
        %v915 = vmul.f32 %v905, %v875
        %v916 = vmul.f32 %v901, %v876
        %v917 = vmul.f32 %v905, %v877
        %v918 = vmul.f32 %v901, %v878
        %v919 = vmul.f32 %v905, %v879
        %v920 = vmul.f32 %v901, %v880
        %v921 = vmul.f32 %v905, %v881
        %v922 = vmul.f32 %v901, %v882
        %v923 = vmul.f32 %v905, %v883
        %v924 = vmul.f32 %v901, %v884
        %v925 = vmul.f32 %v905, %v885
        %v926 = vmul.f32 %v901, %v886
        %v927 = vmul.f32 %v905, %v887
        %v928 = vmul.f32 %v901, %v888
        %v929 = vmul.f32 %v905, %v889
        %v930 = vmul.f32 %v901, %v890
        %v931 = vmul.f32 %v905, %v891
        %v932 = vmul.f32 %v901, %v892
        %v933 = vmul.f32 %v905, %v893
        %v934 = vmul.f32 %v901, %v894
        %v935 = vmul.f32 %v905, %v895
        %v936 = vmul.f32 %v901, %v896
        %v937 = vmul.f32 %v905, %v897
        %v938 = vadd.f32 %v906, 22.627417
        %v939 = vadd.f32 %v907, 22.627417
        %v940 = vadd.f32 %v908, 22.627417
        %v941 = vadd.f32 %v909, 22.627417
        %v942 = vadd.f32 %v910, 22.627417
        %v943 = vadd.f32 %v911, 22.627417
        %v944 = vadd.f32 %v912, 22.627417
        %v945 = vadd.f32 %v913, 22.627417
        %v946 = vadd.f32 %v914, 22.627417
        %v947 = vadd.f32 %v915, 22.627417
        %v948 = vadd.f32 %v916, 22.627417
        %v949 = vadd.f32 %v917, 22.627417
        %v950 = vadd.f32 %v918, 22.627417
        %v951 = vadd.f32 %v919, 22.627417
        %v952 = vadd.f32 %v920, 22.627417
        %v953 = vadd.f32 %v921, 22.627417
        %v954 = vadd.f32 %v922, 22.627417
        %v955 = vadd.f32 %v923, 22.627417
        %v956 = vadd.f32 %v924, 22.627417
        %v957 = vadd.f32 %v925, 22.627417
        %v958 = vadd.f32 %v926, 22.627417
        %v959 = vadd.f32 %v927, 22.627417
        %v960 = vadd.f32 %v928, 22.627417
        %v961 = vadd.f32 %v929, 22.627417
        %v962 = vadd.f32 %v930, 22.627417
        %v963 = vadd.f32 %v931, 22.627417
        %v964 = vadd.f32 %v932, 22.627417
        %v965 = vadd.f32 %v933, 22.627417
        %v966 = vadd.f32 %v934, 22.627417
        %v967 = vadd.f32 %v935, 22.627417
        %v968 = vadd.f32 %v936, 22.627417
        %v969 = vadd.f32 %v937, 22.627417
        %v970 = vld [vmem:[#allocation2] sm:$0xff]
        %v971 = vld [vmem:[#allocation2 + $0x8] sm:$0xff]
        %v972 = vld [vmem:[#allocation2 + $0x10] sm:$0xff]
        %v973 = vld [vmem:[#allocation2 + $0x18] sm:$0xff]
        %v974 = vld [vmem:[#allocation2 + $0x20] sm:$0xff]
        %v975 = vld [vmem:[#allocation2 + $0x28] sm:$0xff]
        %v976 = vld [vmem:[#allocation2 + $0x30] sm:$0xff]
        %v977 = vld [vmem:[#allocation2 + $0x38] sm:$0xff]
        %v978 = vld [vmem:[#allocation2 + $0x40] sm:$0xff]
        %v979 = vld [vmem:[#allocation2 + $0x48] sm:$0xff]
        %v980 = vld [vmem:[#allocation2 + $0x50] sm:$0xff]
        %v981 = vld [vmem:[#allocation2 + $0x58] sm:$0xff]
        %v982 = vld [vmem:[#allocation2 + $0x60] sm:$0xff]
        %v983 = vld [vmem:[#allocation2 + $0x68] sm:$0xff]
        %v984 = vld [vmem:[#allocation2 + $0x70] sm:$0xff]
        %v985 = vld [vmem:[#allocation2 + $0x78] sm:$0xff]
        %v986 = vmin.f32 %v938, %v939
        %987 = vmin.xlane.f32.xlu0 %v986
        %v988 = vpop.xlane.xlu0 %987
        %v989 = vmin.f32 %v940, %v941
        %990 = vmin.xlane.f32.xlu0 %v989
        %v991 = vpop.xlane.xlu0 %990
        %v992 = vmin.f32 %v942, %v943
        %993 = vmin.xlane.f32.xlu0 %v992
        %v994 = vpop.xlane.xlu0 %993
        %v995 = vmin.f32 %v944, %v945
        %996 = vmin.xlane.f32.xlu0 %v995
        %v997 = vpop.xlane.xlu0 %996
        %v998 = vmin.f32 %v946, %v947
        %999 = vmin.xlane.f32.xlu0 %v998
        %v1000 = vpop.xlane.xlu0 %999
        %v1001 = vmin.f32 %v948, %v949
        %1002 = vmin.xlane.f32.xlu0 %v1001
        %v1003 = vpop.xlane.xlu0 %1002
        %v1004 = vmin.f32 %v950, %v951
        %1005 = vmin.xlane.f32.xlu0 %v1004
        %v1006 = vpop.xlane.xlu0 %1005
        %v1007 = vmin.f32 %v952, %v953
        %1008 = vmin.xlane.f32.xlu0 %v1007
        %v1009 = vpop.xlane.xlu0 %1008
        %v1010 = vmin.f32 %v954, %v955
        %1011 = vmin.xlane.f32.xlu0 %v1010
        %v1012 = vpop.xlane.xlu0 %1011
        %v1013 = vmin.f32 %v956, %v957
        %1014 = vmin.xlane.f32.xlu0 %v1013
        %v1015 = vpop.xlane.xlu0 %1014
        %v1016 = vmin.f32 %v958, %v959
        %1017 = vmin.xlane.f32.xlu0 %v1016
        %v1018 = vpop.xlane.xlu0 %1017
        %v1019 = vmin.f32 %v960, %v961
        %1020 = vmin.xlane.f32.xlu0 %v1019
        %v1021 = vpop.xlane.xlu0 %1020
        %v1022 = vmin.f32 %v962, %v963
        %1023 = vmin.xlane.f32.xlu0 %v1022
        %v1024 = vpop.xlane.xlu0 %1023
        %v1025 = vmin.f32 %v964, %v965
        %1026 = vmin.xlane.f32.xlu0 %v1025
        %v1027 = vpop.xlane.xlu0 %1026
        %v1028 = vmin.f32 %v966, %v967
        %1029 = vmin.xlane.f32.xlu0 %v1028
        %v1030 = vpop.xlane.xlu0 %1029
        %v1031 = vmin.f32 %v968, %v969
        %1032 = vmin.xlane.f32.xlu0 %v1031
        %v1033 = vpop.xlane.xlu0 %1032
        %v1034 = vmin.f32 %v970, %v988
        %v1035 = vmin.f32 %v971, %v991
        %v1036 = vmin.f32 %v972, %v994
        %v1037 = vmin.f32 %v973, %v997
        %v1038 = vmin.f32 %v974, %v1000
        %v1039 = vmin.f32 %v975, %v1003
        %v1040 = vmin.f32 %v976, %v1006
        %v1041 = vmin.f32 %v977, %v1009
        %v1042 = vmin.f32 %v978, %v1012
        %v1043 = vmin.f32 %v979, %v1015
        %v1044 = vmin.f32 %v980, %v1018
        %v1045 = vmin.f32 %v981, %v1021
        %v1046 = vmin.f32 %v982, %v1024
        %v1047 = vmin.f32 %v983, %v1027
        %v1048 = vmin.f32 %v984, %v1030
        %v1049 = vmin.f32 %v985, %v1033
        %vm1050 = vcmask 7168
        %1051 = vst.msk [vmem:[#allocation2] sm:$0xff] %vm1050, %v1034
        %1052 = vst.msk [vmem:[#allocation2 + $0x8] sm:$0xff] %vm1050, %v1035
        %1053 = vst.msk [vmem:[#allocation2 + $0x10] sm:$0xff] %vm1050, %v1036
        %1054 = vst.msk [vmem:[#allocation2 + $0x18] sm:$0xff] %vm1050, %v1037
        %1055 = vst.msk [vmem:[#allocation2 + $0x20] sm:$0xff] %vm1050, %v1038
        %1056 = vst.msk [vmem:[#allocation2 + $0x28] sm:$0xff] %vm1050, %v1039
        %1057 = vst.msk [vmem:[#allocation2 + $0x30] sm:$0xff] %vm1050, %v1040
        %1058 = vst.msk [vmem:[#allocation2 + $0x38] sm:$0xff] %vm1050, %v1041
        %1059 = vst.msk [vmem:[#allocation2 + $0x40] sm:$0xff] %vm1050, %v1042
        %1060 = vst.msk [vmem:[#allocation2 + $0x48] sm:$0xff] %vm1050, %v1043
        %1061 = vst.msk [vmem:[#allocation2 + $0x50] sm:$0xff] %vm1050, %v1044
        %1062 = vst.msk [vmem:[#allocation2 + $0x58] sm:$0xff] %vm1050, %v1045
        %1063 = vst.msk [vmem:[#allocation2 + $0x60] sm:$0xff] %vm1050, %v1046
        %1064 = vst.msk [vmem:[#allocation2 + $0x68] sm:$0xff] %vm1050, %v1047
        %1065 = vst.msk [vmem:[#allocation2 + $0x70] sm:$0xff] %vm1050, %v1048
        %1066 = vst.msk [vmem:[#allocation2 + $0x78] sm:$0xff] %vm1050, %v1049
        %v1067 = vlog2.pop %v214
        %v1068 = vmul.f32 %v1067, 0.6931472
        %v1069 = vlog2.pop %v215
        %v1070 = vmul.f32 %v1069, 0.6931472
        %v1071 = vmax.f32 %v1068, -100.0
        %v1072 = vmax.f32 %v1070, -100.0
        %v1073 = vsub.f32 1.0, %v214
        %v1074 = vsub.f32 1.0, %v215
        %v1075 = vlog2.pop %v1073
        %v1076 = vmul.f32 %v1075, 0.6931472
        %v1077 = vlog2.pop %v1074
        %v1078 = vmul.f32 %v1077, 0.6931472
        %v1079 = vmax.f32 %v1076, -100.0
        %v1080 = vmax.f32 %v1078, -100.0
        %v1081 = vld [vmem:[#allocation5] sm:$0x1]
        %v1084 = vrot.slane %v1071, 7
        %v1085 = vrot.slane %v1072, 7
        %v1088 = vmul.f32 %v214, %v1084
        %v1089 = vmul.f32 %v215, %v1085
        %v1092 = vrot.slane %v1079, 7
        %v1093 = vrot.slane %v1080, 7
        %v1096 = vmul.f32 %v1073, %v1092
        %v1097 = vmul.f32 %v1074, %v1093
        %v1098 = vadd.f32 %v1088, %v1096
        %v1099 = vadd.f32 %v1089, %v1097
        %v1102 = vrot.slane %v1098, 3
        %v1103 = vrot.slane %v1099, 3
        %v1106 = vsel %vm827, %v1102, 0.0
        %v1107 = vsel %vm827, %v1103, 0.0
        %v1108 = vadd.f32 %v1106, %v1107
        %1109 = vadd.xlane.f32.xlu0 %v1108
        %v1110 = vpop.xlane.xlu0 %1109
        %v1111 = vrot.slane %v1110, 4
        %v1112 = vadd.f32 %v1110, %v1111
        %v1113 = vrot.slane %v1112, 2
        %v1114 = vadd.f32 %v1112, %v1113
        %v1115 = vrot.slane %v1114, 1
        %v1116 = vadd.f32 %v1114, %v1115
        %s1117 = vtos %v1116
        %v1118 = vstv %s1117
        %v1119 = vsub.f32 0.0, %v1118
        %v1120 = vadd.f32 %v1081, %v1119
        %1121 = vst.msk [vmem:[#allocation5] sm:$0x1] %vm842, %v1120
        // Predicated region
        $region33: #{tpu_custom_call.1} parent=27 // pred_check
          %p1122 = pneg %p189
        $region34: #{tpu_custom_call.1} parent=27 // pred_check_branch
          %1124 = sbr.rel (%p1122) target = $region36
        $region35: #{tpu_custom_call.1} parent=27 // pred_region
          %v1125 = vld [vmem:[#allocation2] sm:$0xff]
          %v1126 = vld [vmem:[#allocation2 + $0x8] sm:$0xff]
          %v1127 = vld [vmem:[#allocation2 + $0x10] sm:$0xff]
          %v1128 = vld [vmem:[#allocation2 + $0x18] sm:$0xff]
          %v1129 = vld [vmem:[#allocation2 + $0x20] sm:$0xff]
          %v1130 = vld [vmem:[#allocation2 + $0x28] sm:$0xff]
          %v1131 = vld [vmem:[#allocation2 + $0x30] sm:$0xff]
          %v1132 = vld [vmem:[#allocation2 + $0x38] sm:$0xff]
          %v1133 = vld [vmem:[#allocation2 + $0x40] sm:$0xff]
          %v1134 = vld [vmem:[#allocation2 + $0x48] sm:$0xff]
          %v1135 = vld [vmem:[#allocation2 + $0x50] sm:$0xff]
          %v1136 = vld [vmem:[#allocation2 + $0x58] sm:$0xff]
          %v1137 = vld [vmem:[#allocation2 + $0x60] sm:$0xff]
          %v1138 = vld [vmem:[#allocation2 + $0x68] sm:$0xff]
          %v1139 = vld [vmem:[#allocation2 + $0x70] sm:$0xff]
          %v1140 = vld [vmem:[#allocation2 + $0x78] sm:$0xff]
          %1157 = vrot.lane.b32.xlu0 %v1125, 2
          %v1158 = vpop.permute.xlu0 %1157
          %1159 = vrot.lane.b32.xlu0 %v1126, 2
          %v1160 = vpop.permute.xlu0 %1159
          %1161 = vrot.lane.b32.xlu0 %v1127, 2
          %v1162 = vpop.permute.xlu0 %1161
          %1163 = vrot.lane.b32.xlu0 %v1128, 2
          %v1164 = vpop.permute.xlu0 %1163
          %1165 = vrot.lane.b32.xlu0 %v1129, 2
          %v1166 = vpop.permute.xlu0 %1165
          %1167 = vrot.lane.b32.xlu0 %v1130, 2
          %v1168 = vpop.permute.xlu0 %1167
          %1169 = vrot.lane.b32.xlu0 %v1131, 2
          %v1170 = vpop.permute.xlu0 %1169
          %1171 = vrot.lane.b32.xlu0 %v1132, 2
          %v1172 = vpop.permute.xlu0 %1171
          %1173 = vrot.lane.b32.xlu0 %v1133, 2
          %v1174 = vpop.permute.xlu0 %1173
          %1175 = vrot.lane.b32.xlu0 %v1134, 2
          %v1176 = vpop.permute.xlu0 %1175
          %1177 = vrot.lane.b32.xlu0 %v1135, 2
          %v1178 = vpop.permute.xlu0 %1177
          %1179 = vrot.lane.b32.xlu0 %v1136, 2
          %v1180 = vpop.permute.xlu0 %1179
          %1181 = vrot.lane.b32.xlu0 %v1137, 2
          %v1182 = vpop.permute.xlu0 %1181
          %1183 = vrot.lane.b32.xlu0 %v1138, 2
          %v1184 = vpop.permute.xlu0 %1183
          %1185 = vrot.lane.b32.xlu0 %v1139, 2
          %v1186 = vpop.permute.xlu0 %1185
          %1187 = vrot.lane.b32.xlu0 %v1140, 2
          %v1188 = vpop.permute.xlu0 %1187
          %v1205 = vmul.f32 %v216, %v1158
          %v1206 = vmul.f32 %v217, %v1160
          %v1207 = vmul.f32 %v218, %v1162
          %v1208 = vmul.f32 %v219, %v1164
          %v1209 = vmul.f32 %v220, %v1166
          %v1210 = vmul.f32 %v221, %v1168
          %v1211 = vmul.f32 %v222, %v1170
          %v1212 = vmul.f32 %v223, %v1172
          %v1213 = vmul.f32 %v224, %v1174
          %v1214 = vmul.f32 %v225, %v1176
          %v1215 = vmul.f32 %v226, %v1178
          %v1216 = vmul.f32 %v227, %v1180
          %v1217 = vmul.f32 %v228, %v1182
          %v1218 = vmul.f32 %v229, %v1184
          %v1219 = vmul.f32 %v230, %v1186
          %v1220 = vmul.f32 %v231, %v1188
          %1237 = vrot.lane.b32.xlu0 %v1205, 126
          %v1238 = vpop.permute.xlu0 %1237
          %1239 = vrot.lane.b32.xlu0 %v1206, 126
          %v1240 = vpop.permute.xlu0 %1239
          %1241 = vrot.lane.b32.xlu0 %v1207, 126
          %v1242 = vpop.permute.xlu0 %1241
          %1243 = vrot.lane.b32.xlu0 %v1208, 126
          %v1244 = vpop.permute.xlu0 %1243
          %1245 = vrot.lane.b32.xlu0 %v1209, 126
          %v1246 = vpop.permute.xlu0 %1245
          %1247 = vrot.lane.b32.xlu0 %v1210, 126
          %v1248 = vpop.permute.xlu0 %1247
          %1249 = vrot.lane.b32.xlu0 %v1211, 126
          %v1250 = vpop.permute.xlu0 %1249
          %1251 = vrot.lane.b32.xlu0 %v1212, 126
          %v1252 = vpop.permute.xlu0 %1251
          %1253 = vrot.lane.b32.xlu0 %v1213, 126
          %v1254 = vpop.permute.xlu0 %1253
          %1255 = vrot.lane.b32.xlu0 %v1214, 126
          %v1256 = vpop.permute.xlu0 %1255
          %1257 = vrot.lane.b32.xlu0 %v1215, 126
          %v1258 = vpop.permute.xlu0 %1257
          %1259 = vrot.lane.b32.xlu0 %v1216, 126
          %v1260 = vpop.permute.xlu0 %1259
          %1261 = vrot.lane.b32.xlu0 %v1217, 126
          %v1262 = vpop.permute.xlu0 %1261
          %1263 = vrot.lane.b32.xlu0 %v1218, 126
          %v1264 = vpop.permute.xlu0 %1263
          %1265 = vrot.lane.b32.xlu0 %v1219, 126
          %v1266 = vpop.permute.xlu0 %1265
          %1267 = vrot.lane.b32.xlu0 %v1220, 126
          %v1268 = vpop.permute.xlu0 %1267
          %v1285 = vsel %vm1050, %v1238, 0.0
          %v1286 = vsel %vm1050, %v1240, 0.0
          %v1287 = vadd.f32 %v1285, %v1286
          %v1288 = vsel %vm1050, %v1242, 0.0
          %v1289 = vadd.f32 %v1287, %v1288
          %v1290 = vsel %vm1050, %v1244, 0.0
          %v1291 = vadd.f32 %v1289, %v1290
          %v1292 = vsel %vm1050, %v1246, 0.0
          %v1293 = vadd.f32 %v1291, %v1292
          %v1294 = vsel %vm1050, %v1248, 0.0
          %v1295 = vadd.f32 %v1293, %v1294
          %v1296 = vsel %vm1050, %v1250, 0.0
          %v1297 = vadd.f32 %v1295, %v1296
          %v1298 = vsel %vm1050, %v1252, 0.0
          %v1299 = vadd.f32 %v1297, %v1298
          %v1300 = vsel %vm1050, %v1254, 0.0
          %v1301 = vadd.f32 %v1299, %v1300
          %v1302 = vsel %vm1050, %v1256, 0.0
          %v1303 = vadd.f32 %v1301, %v1302
          %v1304 = vsel %vm1050, %v1258, 0.0
          %v1305 = vadd.f32 %v1303, %v1304
          %v1306 = vsel %vm1050, %v1260, 0.0
          %v1307 = vadd.f32 %v1305, %v1306
          %v1308 = vsel %vm1050, %v1262, 0.0
          %v1309 = vadd.f32 %v1307, %v1308
          %v1310 = vsel %vm1050, %v1264, 0.0
          %v1311 = vadd.f32 %v1309, %v1310
          %v1312 = vsel %vm1050, %v1266, 0.0
          %v1313 = vadd.f32 %v1311, %v1312
          %v1314 = vsel %vm1050, %v1268, 0.0
          %v1315 = vadd.f32 %v1313, %v1314
          %1316 = vadd.xlane.f32.xlu0 %v1315
          %v1317 = vpop.xlane.xlu0 %1316
          %v1318 = vrot.slane %v1317, 4
          %v1319 = vadd.f32 %v1317, %v1318
          %v1320 = vrot.slane %v1319, 2
          %v1321 = vadd.f32 %v1319, %v1320
          %v1322 = vrot.slane %v1321, 1
          %v1323 = vadd.f32 %v1321, %v1322
          %s1324 = vtos %v1323
          %v1325 = vlaneseq
          %v1326 = vand.u32 %v1325, 127
          %vm1327 = vcmp.eq.s32.totalorder %v1326, 0
          %v1328 = vld [vmem:[#allocation3] sm:$0x1]
          %1330 = vset.pattern.permute.xlu0 0
          %1331 = vperm.xlu0 %1330, %v1328
          %v1332 = vpop.permute.xlu0 %1331
          %v1334 = vlaneseq
          %v1335 = vshrl.u32 %v1334, 7
          %v1336 = vsub.s32 0, %v1335
          %v1337 = vrot.slane %v1332, %v1336
          %v1338 = vsel %vm1327, %v1337, 0.0
          %vm1339 = vcmp.eq.s32.totalorder %v1326, 1
          %v1340 = vld [vmem:[#allocation4] sm:$0x1]
          %1342 = vset.pattern.permute.xlu0 0
          %1343 = vperm.xlu0 %1342, %v1340
          %v1344 = vpop.permute.xlu0 %1343
          %v1346 = vlaneseq
          %v1347 = vshrl.u32 %v1346, 7
          %v1348 = vsub.s32 0, %v1347
          %v1349 = vrot.slane %v1344, %v1348
          %v1350 = vsel %vm1339, %v1349, 0.0
          %v1351 = vadd.f32 %v1338, %v1350
          %vm1352 = vcmp.eq.s32.totalorder %v1326, 2
          %v1353 = vld [vmem:[#allocation5] sm:$0x1]
          %1355 = vset.pattern.permute.xlu0 0
          %1356 = vperm.xlu0 %1355, %v1353
          %v1357 = vpop.permute.xlu0 %1356
          %v1359 = vlaneseq
          %v1360 = vshrl.u32 %v1359, 7
          %v1361 = vsub.s32 0, %v1360
          %v1362 = vrot.slane %v1357, %v1361
          %v1363 = vsel %vm1352, %v1362, 0.0
          %v1364 = vadd.f32 %v1351, %v1363
          %vm1365 = vcmp.eq.s32.totalorder %v1326, 3
          %v1366 = vstv %s1324
          %v1367 = vsel %vm1365, %v1366, 0.0
          %v1368 = vadd.f32 %v1364, %v1367
          %1369 = vst [vmem:[%s173] sm:$0x1] %v1368
        $region36: #{tpu_custom_call.1} parent=27 // pred_fallthru
          _
        %s1370 = sand.u32 %s90, 1
        %s1371 = scalar_lea.sflag [#allocation7], %s1370
        %s1372 = sand.u32 %s90, 1
        %s1373 = scalar_lea.vmem [#allocation6], %s1372
        // Predicated region
        $region37: #{tpu_custom_call.1} parent=27 // pred_check
          %p1374 = pneg %p100
        $region38: #{tpu_custom_call.1} parent=27 // pred_check_branch
          %1376 = sbr.rel (%p1374) target = $region40
        $region39: #{tpu_custom_call.1} parent=27 // pred_region
          %s1378 = ssub.s32 16, 16
          %1379 = vsyncadd %s1371, %s1378
          %s1380 = smul.addr %s20, 16
          %s1381 = scalar_lea.hbm %s2, %s1380
          %s1383 = sshll.u32 %s1373, 4
          %s1384 = int_to_ptr.vmem [resolvable:$true] %s1383
          %1386 = dma.vmem_to_hbm [thread:$0]  %s1384, 16, %s1381, %s1371
        $region40: #{tpu_custom_call.1} parent=27 // pred_fallthru
          _
      $region28: #{tpu_custom_call.1} parent=5 // pred_fallthru
        _
      %p1387 = scmp.le.s32.totalorder 2, %s11
      // Predicated region
      $region41: #{tpu_custom_call.1} parent=5 // pred_check
        %p1388 = pneg %p1387
      $region42: #{tpu_custom_call.1} parent=5 // pred_check_branch
        %1390 = sbr.rel (%p1388) target = $region44
      $region43: #{tpu_custom_call.1} parent=5 // pred_region
        %s1391 = ssub.s32 %s11, 2
        // Predicated region
        $region45: #{tpu_custom_call.1} parent=43 // pred_check
          %p1392 = pneg %p106
        $region46: #{tpu_custom_call.1} parent=43 // pred_check_branch
          %1394 = sbr.rel (%p1392) target = $region48
        $region47: #{tpu_custom_call.1} parent=43 // pred_region
          %s1395 = sand.u32 %s91, 1
          %s1396 = scalar_lea.sflag [#allocation7], %s1395
          %s1397 = sand.u32 %s91, 1
          %s1398 = scalar_lea.vmem [#allocation6], %s1397
          %1399 = dma.done %s1396, 16
        $region48: #{tpu_custom_call.1} parent=43 // pred_fallthru
          _
      $region44: #{tpu_custom_call.1} parent=5 // pred_fallthru
        _
    $region6: #{tpu_custom_call.1} parent=1 // loop_footer
      %s15 = sadd.s32 1, %s11
    $region7: #{tpu_custom_call.1} parent=1 // loop_footer_branch
      %10 = sbr.rel target = $region3
    $region8: #{tpu_custom_call.1} parent=1 // loop_exit
      _
    %1400 = vsyncpa [#allocation7], 1
    %s1401 = scalar_lea.sflag [#allocation7], 1
    %1402 = vsyncpa %s1401, 1

</llo_original>
